<compile_context>
chip_gen: v6e
topology: v6e:2x2x1
jax: 0.10.0
libtpu: 0.0.40
codegen_flags: <defaults>
</compile_context>

<pallas_src>
import functools

import jax
import jax.numpy as jnp
from jax import lax
from jax.experimental import pallas as pl
from jax.experimental.pallas import tpu as pltpu

# ---- configuration matching MultiScale_TemporalConv(16, 48, kernel_size=3,
#      stride=1, dilations=[1,2,3,4], residual=True) --------------------------
IN_C = 16
OUT_C = 48
KS = 3
DILATIONS = (1, 2, 3, 4)
NUM_BRANCHES = len(DILATIONS) + 2          # 6
BC = OUT_C // NUM_BRANCHES                 # 8 channels per branch
N, T, V = 2, 16, 8                         # batch, frames, joints

# temporal offsets needed by the dilated branches (maxpool reuses +/-1 rolls)
OFFSETS = tuple(s * d for d in DILATIONS for s in (1, -1))   # (1,-1,2,-2,...)
NUM_OFF = len(OFFSETS)                     # 8
assert 1 in DILATIONS                      # maxpool branch reuses +/-1 rolls
HDIM = NUM_BRANCHES * BC + OUT_C           # 96 lanes of h (branches + residual)
KDIM = HDIM + NUM_OFF * BC + BC            # 168-lane slab fed to the wide dot
MP_LO, MP_HI = (NUM_BRANCHES - 2) * BC, (NUM_BRANCHES - 1) * BC   # maxpool lanes


def ms_tcn_kernel(x_ref, wcat_ref, bcat_ref, floor_ref, wbig_ref, bias_ref,
                  mask_ref, o_ref, *, chunk):
    n_chunks = x_ref.shape[0] // chunk
    wcat = wcat_ref[...]                      # (IN_C, 96)
    bcat = bcat_ref[...]                      # (1, 96)
    floor = floor_ref[...]                    # (1, 96)
    wbig = wbig_ref[...]                      # (168, 48)
    bias = bias_ref[...]                      # (1, 48)
    msk = mask_ref[...]                       # (chunk, 64) f32 validity mask

    def body(ci, carry):
        r0 = pl.multiple_of(ci * chunk, chunk)
        x_c = x_ref[pl.ds(r0, chunk), :]      # (chunk, IN_C)

        # Fused 1x1 convs: 6 branches + residual; bias & eval-BN folded host
        # side; branch ReLUs become one max against a per-lane floor vector.
        h = jnp.dot(x_c, wcat, preferred_element_type=jnp.float32) + bcat
        h = jnp.maximum(h, floor)             # ReLU only where floor == 0
        hb = h[:, :NUM_BRANCHES * BC]         # (chunk, 48) branch activations

        # Masked temporal shifts: keep only the 8 branch lanes each offset
        # actually feeds; the +/-1 rolls also provide the maxpool neighbours.
        parts = [h]
        mp_nbr = []
        for k, off in enumerate(OFFSETS):
            b = DILATIONS.index(abs(off))
            rolled = pltpu.roll(hb, shift=(-off) % chunk, axis=0)
            mk = msk[:, k * BC:(k + 1) * BC]
            parts.append(rolled[:, b * BC:(b + 1) * BC] * mk)
            if abs(off) == 1:
                mp_nbr.append(rolled[:, MP_LO:MP_HI] * mk)

        # MaxPool2d((3,1), stride 1, pad (1,0)): zero padding == ignore-pad
        # because the branch activations are post-ReLU (>= 0).
        mp = jnp.maximum(jnp.maximum(mp_nbr[0], hb[:, MP_LO:MP_HI]), mp_nbr[1])

        # One wide dot produces all 48 output lanes: center taps, dilated
        # taps, plain-branch passthrough, maxpool BN scale and residual all
        # live in wbig — no concatenate over branches, no acc chain.
        slab = jnp.concatenate(parts + [mp], axis=1)          # (chunk, 168)
        out = jnp.dot(slab, wbig, preferred_element_type=jnp.float32) + bias
        o_ref[pl.ds(r0, chunk), :] = jnp.maximum(out, 0.0).astype(o_ref.dtype)
        return carry

    lax.fori_loop(0, n_chunks, body, 0, unroll=True)


def build_shift_mask(chunk, t):
    """f32 (chunk, NUM_OFF*BC) validity mask; columns k*BC:(k+1)*BC = offset k."""
    frames = jnp.arange(chunk, dtype=jnp.int32) % t
    cols = []
    for off in OFFSETS:
        valid = (frames < t - off) if off > 0 else (frames >= -off)
        cols.append(jnp.broadcast_to(valid[:, None], (chunk, BC)))
    return jnp.concatenate(cols, axis=1).astype(jnp.float32)


def ms_tcn_forward(x_nchw, kparams, num_tiles=2, chunk=64):
    # num_tiles=2: shards rows across both TensorCores on v7x ("parallel").
    # On v5e/v6e (1 TC) the extra grid step costs ~0.35us; pass num_tiles=1.
    n, c, t, v = x_nchw.shape
    m_total = n * v * t
    x2 = jnp.transpose(x_nchw, (0, 3, 2, 1)).reshape(m_total, c)

    block_m = m_total // num_tiles
    assert block_m * num_tiles == m_total
    chunk = min(chunk, block_m)
    assert block_m % chunk == 0 and chunk % t == 0 and chunk % 8 == 0

    mask = build_shift_mask(chunk, t)
    operands = tuple(kparams) + (mask,)

    def full_spec(a):
        nd = a.ndim
        return pl.BlockSpec(a.shape, lambda i, _nd=nd: (0,) * _nd)

    out = pl.pallas_call(
        functools.partial(ms_tcn_kernel, chunk=chunk),
        out_shape=jax.ShapeDtypeStruct((m_total, OUT_C), jnp.float32),
        grid=(num_tiles,),
        in_specs=[pl.BlockSpec((block_m, c), lambda i: (i, 0))]
                 + [full_spec(a) for a in operands],
        out_specs=pl.BlockSpec((block_m, OUT_C), lambda i: (i, 0)),
        compiler_params=pltpu.CompilerParams(
            dimension_semantics=("parallel",)),
    )(x2, *operands)

    # back to NCHW
    return jnp.transpose(out.reshape(n, v, t, OUT_C), (0, 3, 2, 1))


# --------------------- host-side parameter fusion / packing ------------------
def pack_params(params):
    """Fold conv biases + eval-mode BN into the two fused kernel weights."""
    w1, p1, wt, p2, pmp, wr, pr = params
    nb, nd = NUM_BRANCHES, len(DILATIONS)
    b1, s1, t1 = p1[:, 0], p1[:, 1], p1[:, 2]          # (6, BC) each
    bt, s2, t2 = p2[:, 0], p2[:, 1], p2[:, 2]          # (4, BC) each
    smp, tmp_ = pmp[0], pmp[1]                         # (BC,)
    br, sr, tr = pr[0], pr[1], pr[2]                   # (OUT_C,)

    # fused 1x1 weight (16, 96): 6 branch convs then residual; BN scale folded
    wcat = jnp.concatenate(
        [w1[b] * s1[b][None, :] for b in range(nb)] + [wr * sr[None, :]],
        axis=1)
    bcat = jnp.concatenate(
        [b1[b] * s1[b] + t1[b] for b in range(nb)] + [br * sr + tr])
    # ReLU floor: 0 on branches 0..4 (ReLU applied), -1e30 elsewhere (no ReLU)
    floor = jnp.concatenate([
        jnp.zeros(((nd + 1) * BC,), jnp.float32),
        jnp.full((BC + OUT_C,), -1e30, jnp.float32)])

    # Wide second-stage weight (168, 48), matching the in-kernel slab layout:
    #   rows   0: 96  -> h        : center taps, plain identity, residual eye
    #   rows  96:160  -> 8 masked shifted 8-lane slices (one 8x8 block each)
    #   rows 160:168  -> maxpool lanes, scaled by diag(smp)
    wbig = jnp.zeros((KDIM, OUT_C), jnp.float32)
    for b in range(nd):                                 # center taps (off = 0)
        wbig = wbig.at[b * BC:(b + 1) * BC, b * BC:(b + 1) * BC].set(
            wt[b, KS // 2] * s2[b][None, :])
    wbig = wbig.at[(nb - 1) * BC:nb * BC,               # plain branch: identity
                   (nb - 1) * BC:nb * BC].set(jnp.eye(BC, dtype=jnp.float32))
    wbig = wbig.at[nb * BC:HDIM, :].set(jnp.eye(OUT_C, dtype=jnp.float32))  # residual
    for k, off in enumerate(OFFSETS):                   # dilated taps, no zero pad
        b = DILATIONS.index(abs(off))
        j = KS - 1 if off > 0 else 0                    # +d -> last tap, -d -> first
        r0 = HDIM + k * BC
        wbig = wbig.at[r0:r0 + BC, b * BC:(b + 1) * BC].set(
            wt[b, j] * s2[b][None, :])
    wbig = wbig.at[HDIM + NUM_OFF * BC:, MP_LO:MP_HI].set(jnp.diag(smp))

    bias48 = jnp.zeros((OUT_C,), jnp.float32)
    for b in range(nd):
        bias48 = bias48.at[b * BC:(b + 1) * BC].set(bt[b] * s2[b] + t2[b])
    bias48 = bias48.at[MP_LO:MP_HI].set(tmp_)           # maxpool BN shift

    return (wcat, bcat.reshape(1, -1), floor.reshape(1, -1), wbig,
            bias48.reshape(1, -1))


# ------------------------- deterministic parameters -------------------------
def init_params(key):
    keys = iter(jax.random.split(key, 32))

    def w(shape, scale=0.1):
        return scale * jax.random.normal(next(keys), shape, jnp.float32)

    def bn(shape, eps=1e-5):
        gamma = 1.0 + 0.1 * jax.random.normal(next(keys), shape, jnp.float32)
        beta = 0.05 * jax.random.normal(next(keys), shape, jnp.float32)
        mean = 0.1 * jax.random.normal(next(keys), shape, jnp.float32)
        var = 1.0 + 0.1 * jax.random.uniform(next(keys), shape, jnp.float32)
        scale = gamma * lax.rsqrt(var + eps)
        shift = beta - mean * scale
        return scale, shift

    w1 = w((NUM_BRANCHES, IN_C, BC))
    b1 = w((NUM_BRANCHES, BC))
    s1, t1 = bn((NUM_BRANCHES, BC))
    p1 = jnp.stack([b1, s1, t1], axis=1)                  # (6, 3, BC)

    wt = w((len(DILATIONS), KS, BC, BC))
    bt = w((len(DILATIONS), BC))
    s2, t2 = bn((len(DILATIONS), BC))
    p2 = jnp.stack([bt, s2, t2], axis=1)                  # (4, 3, BC)

    smp, tmp_ = bn((BC,))
    pmp = jnp.stack([smp, tmp_], axis=0)                  # (2, BC)

    wr = w((IN_C, OUT_C))
    br = w((OUT_C,))
    sr, tr = bn((OUT_C,))
    pr = jnp.stack([br, sr, tr], axis=0)                  # (3, OUT_C)

    return (w1, p1, wt, p2, pmp, wr, pr)


# ------------------------------ plain-JAX reference --------------------------
def reference_rtc(x_rtc, params):
    w1, p1, wt, p2, pmp, wr, pr = params

    def shift(h, off):
        if off == 0:
            return h
        if off > 0:
            return jnp.pad(h[:, off:, :], ((0, 0), (0, off), (0, 0)))
        return jnp.pad(h[:, :off, :], ((0, 0), (-off, 0), (0, 0)))

    outs = []
    for b in range(NUM_BRANCHES):
        h = x_rtc @ w1[b] + p1[b, 0]
        h = h * p1[b, 1] + p1[b, 2]
        if b < NUM_BRANCHES - 1:
            h = jnp.maximum(h, 0.0)
        if b < len(DILATIONS):
            d = DILATIONS[b]
            y = sum(shift(h, (j - KS // 2) * d) @ wt[b, j] for j in range(KS))
            y = y + p2[b, 0]
            y = y * p2[b, 1] + p2[b, 2]
        elif b == len(DILATIONS):
            y = jnp.maximum(jnp.maximum(shift(h, -1), h), shift(h, 1))
            y = y * pmp[0] + pmp[1]
        else:
            y = h
        outs.append(y)
    out = jnp.concatenate(outs, axis=-1)
    res = x_rtc @ wr + pr[0]
    res = res * pr[1] + pr[2]
    return jnp.maximum(out + res, 0.0)


if __name__ == "__main__":
    key = jax.random.PRNGKey(0)
    kx, kp = jax.random.split(key)
    x = jax.random.normal(kx, (N, IN_C, T, V), jnp.float32)   # NCHW
    params = init_params(kp)
    kparams = pack_params(params)

    y = ms_tcn_forward(x, kparams)          # num_tiles=2 (both TCs on v7x)
    y = jax.block_until_ready(y)

    x_rtc = jnp.transpose(x, (0, 3, 2, 1)).reshape(N * V, T, IN_C)
    ref = reference_rtc(x_rtc, params)
    ref_nchw = jnp.transpose(ref.reshape(N, V, T, OUT_C), (0, 3, 2, 1))

    assert y.shape == (N, OUT_C, T, V)
    assert jnp.allclose(y, ref_nchw, atol=1e-3, rtol=1e-3), "mismatch vs reference"
    print("KERNEL_OK")
</pallas_src>

<mosaic_0001>
module attributes {stable_mosaic.version = 11 : i64} {
  func.func @ms_tcn_kernel(%arg0: i32, %arg1: memref<128x16xf32, #tpu.memory_space<vmem>>, %arg2: memref<16x96xf32, #tpu.memory_space<vmem>>, %arg3: memref<1x96xf32, #tpu.memory_space<vmem>>, %arg4: memref<1x96xf32, #tpu.memory_space<vmem>>, %arg5: memref<168x48xf32, #tpu.memory_space<vmem>>, %arg6: memref<1x48xf32, #tpu.memory_space<vmem>>, %arg7: memref<64x64xf32, #tpu.memory_space<vmem>>, %arg8: memref<128x48xf32, #tpu.memory_space<vmem>>) attributes {dimension_semantics = [#tpu.dimension_semantics<parallel>], iteration_bounds = array<i64: 2>, scalar_prefetch = 0 : i64, scratch_operands = 0 : i64, tpu.core_type = #tpu.core_type<tc>, window_params = [{transform_indices = @transform_0, window_bounds = array<i64: 128, 16>}, {pipeline_mode = #tpu.pipeline_mode<synchronous>, transform_indices = @transform_1, window_bounds = array<i64: 16, 96>}, {pipeline_mode = #tpu.pipeline_mode<synchronous>, transform_indices = @transform_2, window_bounds = array<i64: 1, 96>}, {pipeline_mode = #tpu.pipeline_mode<synchronous>, transform_indices = @transform_3, window_bounds = array<i64: 1, 96>}, {pipeline_mode = #tpu.pipeline_mode<synchronous>, transform_indices = @transform_4, window_bounds = array<i64: 168, 48>}, {pipeline_mode = #tpu.pipeline_mode<synchronous>, transform_indices = @transform_5, window_bounds = array<i64: 1, 48>}, {pipeline_mode = #tpu.pipeline_mode<synchronous>, transform_indices = @transform_6, window_bounds = array<i64: 64, 64>}, {transform_indices = @transform_7, window_bounds = array<i64: 128, 48>}]} {
    %c0 = arith.constant 0 : index
    %c0_0 = arith.constant 0 : index
    %0 = vector.load %arg2[%c0, %c0_0] : memref<16x96xf32, #tpu.memory_space<vmem>>, vector<16x96xf32>
    %c0_1 = arith.constant 0 : index
    %c0_2 = arith.constant 0 : index
    %1 = vector.load %arg3[%c0_1, %c0_2] : memref<1x96xf32, #tpu.memory_space<vmem>>, vector<1x96xf32>
    %c0_3 = arith.constant 0 : index
    %c0_4 = arith.constant 0 : index
    %2 = vector.load %arg4[%c0_3, %c0_4] : memref<1x96xf32, #tpu.memory_space<vmem>>, vector<1x96xf32>
    %c0_5 = arith.constant 0 : index
    %c0_6 = arith.constant 0 : index
    %3 = vector.load %arg5[%c0_5, %c0_6] : memref<168x48xf32, #tpu.memory_space<vmem>>, vector<168x48xf32>
    %c0_7 = arith.constant 0 : index
    %c0_8 = arith.constant 0 : index
    %4 = vector.load %arg6[%c0_7, %c0_8] : memref<1x48xf32, #tpu.memory_space<vmem>>, vector<1x48xf32>
    %c0_9 = arith.constant 0 : index
    %c0_10 = arith.constant 0 : index
    %5 = vector.load %arg7[%c0_9, %c0_10] : memref<64x64xf32, #tpu.memory_space<vmem>>, vector<64x64xf32>
    %c0_i32 = arith.constant 0 : i32
    %c64_i32 = arith.constant 64 : i32
    %6 = arith.muli %c0_i32, %c64_i32 : i32
    %7 = tpu.assume_multiple %6, 64 : i32
    %8 = arith.index_cast %7 : i32 to index
    %c0_11 = arith.constant 0 : index
    %9 = vector.load %arg1[%8, %c0_11] : memref<128x16xf32, #tpu.memory_space<vmem>>, vector<64x16xf32>
    %cst = arith.constant dense<0.000000e+00> : vector<64x96xf32>
    %10 = tpu.matmul %9, %0, %cst {dimension_numbers = #tpu.dot_dimension_numbers<[1], [0], [0], [1], [0, 0, 1, 1], [], []>} : vector<64x16xf32>, vector<16x96xf32>, vector<64x96xf32> -> vector<64x96xf32>
    %11 = vector.broadcast %1 : vector<1x96xf32> to vector<64x96xf32>
    %12 = arith.addf %10, %11 : vector<64x96xf32>
    %13 = vector.broadcast %2 : vector<1x96xf32> to vector<64x96xf32>
    %14 = arith.maximumf %12, %13 : vector<64x96xf32>
    %15 = vector.extract_strided_slice %14 {offsets = [0, 0], sizes = [64, 48], strides = [1, 1]} : vector<64x96xf32> to vector<64x48xf32>
    %c63_i32 = arith.constant 63 : i32
    %16 = tpu.dynamic_rotate %15 by %c63_i32 dim 0 : vector<64x48xf32>, i32 -> vector<64x48xf32>
    %17 = vector.extract_strided_slice %5 {offsets = [0, 0], sizes = [64, 8], strides = [1, 1]} : vector<64x64xf32> to vector<64x8xf32>
    %18 = vector.extract_strided_slice %16 {offsets = [0, 0], sizes = [64, 8], strides = [1, 1]} : vector<64x48xf32> to vector<64x8xf32>
    %19 = arith.mulf %18, %17 : vector<64x8xf32>
    %20 = vector.extract_strided_slice %16 {offsets = [0, 32], sizes = [64, 8], strides = [1, 1]} : vector<64x48xf32> to vector<64x8xf32>
    %21 = arith.mulf %20, %17 : vector<64x8xf32>
    %c1_i32 = arith.constant 1 : i32
    %22 = tpu.dynamic_rotate %15 by %c1_i32 dim 0 : vector<64x48xf32>, i32 -> vector<64x48xf32>
    %23 = vector.extract_strided_slice %5 {offsets = [0, 8], sizes = [64, 8], strides = [1, 1]} : vector<64x64xf32> to vector<64x8xf32>
    %24 = vector.extract_strided_slice %22 {offsets = [0, 0], sizes = [64, 8], strides = [1, 1]} : vector<64x48xf32> to vector<64x8xf32>
    %25 = arith.mulf %24, %23 : vector<64x8xf32>
    %26 = vector.extract_strided_slice %22 {offsets = [0, 32], sizes = [64, 8], strides = [1, 1]} : vector<64x48xf32> to vector<64x8xf32>
    %27 = arith.mulf %26, %23 : vector<64x8xf32>
    %c62_i32 = arith.constant 62 : i32
    %28 = tpu.dynamic_rotate %15 by %c62_i32 dim 0 : vector<64x48xf32>, i32 -> vector<64x48xf32>
    %29 = vector.extract_strided_slice %5 {offsets = [0, 16], sizes = [64, 8], strides = [1, 1]} : vector<64x64xf32> to vector<64x8xf32>
    %30 = vector.extract_strided_slice %28 {offsets = [0, 8], sizes = [64, 8], strides = [1, 1]} : vector<64x48xf32> to vector<64x8xf32>
    %31 = arith.mulf %30, %29 : vector<64x8xf32>
    %c2_i32 = arith.constant 2 : i32
    %32 = tpu.dynamic_rotate %15 by %c2_i32 dim 0 : vector<64x48xf32>, i32 -> vector<64x48xf32>
    %33 = vector.extract_strided_slice %5 {offsets = [0, 24], sizes = [64, 8], strides = [1, 1]} : vector<64x64xf32> to vector<64x8xf32>
    %34 = vector.extract_strided_slice %32 {offsets = [0, 8], sizes = [64, 8], strides = [1, 1]} : vector<64x48xf32> to vector<64x8xf32>
    %35 = arith.mulf %34, %33 : vector<64x8xf32>
    %c61_i32 = arith.constant 61 : i32
    %36 = tpu.dynamic_rotate %15 by %c61_i32 dim 0 : vector<64x48xf32>, i32 -> vector<64x48xf32>
    %37 = vector.extract_strided_slice %5 {offsets = [0, 32], sizes = [64, 8], strides = [1, 1]} : vector<64x64xf32> to vector<64x8xf32>
    %38 = vector.extract_strided_slice %36 {offsets = [0, 16], sizes = [64, 8], strides = [1, 1]} : vector<64x48xf32> to vector<64x8xf32>
    %39 = arith.mulf %38, %37 : vector<64x8xf32>
    %c3_i32 = arith.constant 3 : i32
    %40 = tpu.dynamic_rotate %15 by %c3_i32 dim 0 : vector<64x48xf32>, i32 -> vector<64x48xf32>
    %41 = vector.extract_strided_slice %5 {offsets = [0, 40], sizes = [64, 8], strides = [1, 1]} : vector<64x64xf32> to vector<64x8xf32>
    %42 = vector.extract_strided_slice %40 {offsets = [0, 16], sizes = [64, 8], strides = [1, 1]} : vector<64x48xf32> to vector<64x8xf32>
    %43 = arith.mulf %42, %41 : vector<64x8xf32>
    %c60_i32 = arith.constant 60 : i32
    %44 = tpu.dynamic_rotate %15 by %c60_i32 dim 0 : vector<64x48xf32>, i32 -> vector<64x48xf32>
    %45 = vector.extract_strided_slice %5 {offsets = [0, 48], sizes = [64, 8], strides = [1, 1]} : vector<64x64xf32> to vector<64x8xf32>
    %46 = vector.extract_strided_slice %44 {offsets = [0, 24], sizes = [64, 8], strides = [1, 1]} : vector<64x48xf32> to vector<64x8xf32>
    %47 = arith.mulf %46, %45 : vector<64x8xf32>
    %c4_i32 = arith.constant 4 : i32
    %48 = tpu.dynamic_rotate %15 by %c4_i32 dim 0 : vector<64x48xf32>, i32 -> vector<64x48xf32>
    %49 = vector.extract_strided_slice %5 {offsets = [0, 56], sizes = [64, 8], strides = [1, 1]} : vector<64x64xf32> to vector<64x8xf32>
    %50 = vector.extract_strided_slice %48 {offsets = [0, 24], sizes = [64, 8], strides = [1, 1]} : vector<64x48xf32> to vector<64x8xf32>
    %51 = arith.mulf %50, %49 : vector<64x8xf32>
    %52 = vector.extract_strided_slice %15 {offsets = [0, 32], sizes = [64, 8], strides = [1, 1]} : vector<64x48xf32> to vector<64x8xf32>
    %53 = arith.maximumf %21, %52 : vector<64x8xf32>
    %54 = arith.maximumf %53, %27 : vector<64x8xf32>
    %55 = tpu.concatenate %14, %19, %25, %31, %35, %39, %43, %47, %51, %54 in 1 : vector<64x96xf32>, vector<64x8xf32>, vector<64x8xf32>, vector<64x8xf32>, vector<64x8xf32>, vector<64x8xf32>, vector<64x8xf32>, vector<64x8xf32>, vector<64x8xf32>, vector<64x8xf32> -> vector<64x168xf32>
    %cst_12 = arith.constant dense<0.000000e+00> : vector<64x48xf32>
    %56 = tpu.matmul %55, %3, %cst_12 {dimension_numbers = #tpu.dot_dimension_numbers<[1], [0], [0], [1], [0, 0, 1, 1], [], []>} : vector<64x168xf32>, vector<168x48xf32>, vector<64x48xf32> -> vector<64x48xf32>
    %57 = vector.broadcast %4 : vector<1x48xf32> to vector<64x48xf32>
    %58 = arith.addf %56, %57 : vector<64x48xf32>
    %cst_13 = arith.constant 0.000000e+00 : f32
    %59 = vector.broadcast %cst_13 : f32 to vector<64x48xf32>
    %60 = arith.maximumf %58, %59 : vector<64x48xf32>
    %61 = arith.index_cast %7 : i32 to index
    %c0_14 = arith.constant 0 : index
    %62 = vector.load %arg8[%61, %c0_14] : memref<128x48xf32, #tpu.memory_space<vmem>>, vector<64x48xf32>
    tpu.vector_store %arg8[%61, %c0_14], %60 {strides = array<i32>} : memref<128x48xf32, #tpu.memory_space<vmem>>, vector<64x48xf32>,
    %c1_i32_15 = arith.constant 1 : i32
    %c64_i32_16 = arith.constant 64 : i32
    %63 = arith.muli %c1_i32_15, %c64_i32_16 : i32
    %64 = tpu.assume_multiple %63, 64 : i32
    %65 = arith.index_cast %64 : i32 to index
    %c0_17 = arith.constant 0 : index
    %66 = vector.load %arg1[%65, %c0_17] : memref<128x16xf32, #tpu.memory_space<vmem>>, vector<64x16xf32>
    %cst_18 = arith.constant dense<0.000000e+00> : vector<64x96xf32>
    %67 = tpu.matmul %66, %0, %cst_18 {dimension_numbers = #tpu.dot_dimension_numbers<[1], [0], [0], [1], [0, 0, 1, 1], [], []>} : vector<64x16xf32>, vector<16x96xf32>, vector<64x96xf32> -> vector<64x96xf32>
    %68 = vector.broadcast %1 : vector<1x96xf32> to vector<64x96xf32>
    %69 = arith.addf %67, %68 : vector<64x96xf32>
    %70 = vector.broadcast %2 : vector<1x96xf32> to vector<64x96xf32>
    %71 = arith.maximumf %69, %70 : vector<64x96xf32>
    %72 = vector.extract_strided_slice %71 {offsets = [0, 0], sizes = [64, 48], strides = [1, 1]} : vector<64x96xf32> to vector<64x48xf32>
    %c63_i32_19 = arith.constant 63 : i32
    %73 = tpu.dynamic_rotate %72 by %c63_i32_19 dim 0 : vector<64x48xf32>, i32 -> vector<64x48xf32>
    %74 = vector.extract_strided_slice %5 {offsets = [0, 0], sizes = [64, 8], strides = [1, 1]} : vector<64x64xf32> to vector<64x8xf32>
    %75 = vector.extract_strided_slice %73 {offsets = [0, 0], sizes = [64, 8], strides = [1, 1]} : vector<64x48xf32> to vector<64x8xf32>
    %76 = arith.mulf %75, %74 : vector<64x8xf32>
    %77 = vector.extract_strided_slice %73 {offsets = [0, 32], sizes = [64, 8], strides = [1, 1]} : vector<64x48xf32> to vector<64x8xf32>
    %78 = arith.mulf %77, %74 : vector<64x8xf32>
    %c1_i32_20 = arith.constant 1 : i32
    %79 = tpu.dynamic_rotate %72 by %c1_i32_20 dim 0 : vector<64x48xf32>, i32 -> vector<64x48xf32>
    %80 = vector.extract_strided_slice %5 {offsets = [0, 8], sizes = [64, 8], strides = [1, 1]} : vector<64x64xf32> to vector<64x8xf32>
    %81 = vector.extract_strided_slice %79 {offsets = [0, 0], sizes = [64, 8], strides = [1, 1]} : vector<64x48xf32> to vector<64x8xf32>
    %82 = arith.mulf %81, %80 : vector<64x8xf32>
    %83 = vector.extract_strided_slice %79 {offsets = [0, 32], sizes = [64, 8], strides = [1, 1]} : vector<64x48xf32> to vector<64x8xf32>
    %84 = arith.mulf %83, %80 : vector<64x8xf32>
    %c62_i32_21 = arith.constant 62 : i32
    %85 = tpu.dynamic_rotate %72 by %c62_i32_21 dim 0 : vector<64x48xf32>, i32 -> vector<64x48xf32>
    %86 = vector.extract_strided_slice %5 {offsets = [0, 16], sizes = [64, 8], strides = [1, 1]} : vector<64x64xf32> to vector<64x8xf32>
    %87 = vector.extract_strided_slice %85 {offsets = [0, 8], sizes = [64, 8], strides = [1, 1]} : vector<64x48xf32> to vector<64x8xf32>
    %88 = arith.mulf %87, %86 : vector<64x8xf32>
    %c2_i32_22 = arith.constant 2 : i32
    %89 = tpu.dynamic_rotate %72 by %c2_i32_22 dim 0 : vector<64x48xf32>, i32 -> vector<64x48xf32>
    %90 = vector.extract_strided_slice %5 {offsets = [0, 24], sizes = [64, 8], strides = [1, 1]} : vector<64x64xf32> to vector<64x8xf32>
    %91 = vector.extract_strided_slice %89 {offsets = [0, 8], sizes = [64, 8], strides = [1, 1]} : vector<64x48xf32> to vector<64x8xf32>
    %92 = arith.mulf %91, %90 : vector<64x8xf32>
    %c61_i32_23 = arith.constant 61 : i32
    %93 = tpu.dynamic_rotate %72 by %c61_i32_23 dim 0 : vector<64x48xf32>, i32 -> vector<64x48xf32>
    %94 = vector.extract_strided_slice %5 {offsets = [0, 32], sizes = [64, 8], strides = [1, 1]} : vector<64x64xf32> to vector<64x8xf32>
    %95 = vector.extract_strided_slice %93 {offsets = [0, 16], sizes = [64, 8], strides = [1, 1]} : vector<64x48xf32> to vector<64x8xf32>
    %96 = arith.mulf %95, %94 : vector<64x8xf32>
    %c3_i32_24 = arith.constant 3 : i32
    %97 = tpu.dynamic_rotate %72 by %c3_i32_24 dim 0 : vector<64x48xf32>, i32 -> vector<64x48xf32>
    %98 = vector.extract_strided_slice %5 {offsets = [0, 40], sizes = [64, 8], strides = [1, 1]} : vector<64x64xf32> to vector<64x8xf32>
    %99 = vector.extract_strided_slice %97 {offsets = [0, 16], sizes = [64, 8], strides = [1, 1]} : vector<64x48xf32> to vector<64x8xf32>
    %100 = arith.mulf %99, %98 : vector<64x8xf32>
    %c60_i32_25 = arith.constant 60 : i32
    %101 = tpu.dynamic_rotate %72 by %c60_i32_25 dim 0 : vector<64x48xf32>, i32 -> vector<64x48xf32>
    %102 = vector.extract_strided_slice %5 {offsets = [0, 48], sizes = [64, 8], strides = [1, 1]} : vector<64x64xf32> to vector<64x8xf32>
    %103 = vector.extract_strided_slice %101 {offsets = [0, 24], sizes = [64, 8], strides = [1, 1]} : vector<64x48xf32> to vector<64x8xf32>
    %104 = arith.mulf %103, %102 : vector<64x8xf32>
    %c4_i32_26 = arith.constant 4 : i32
    %105 = tpu.dynamic_rotate %72 by %c4_i32_26 dim 0 : vector<64x48xf32>, i32 -> vector<64x48xf32>
    %106 = vector.extract_strided_slice %5 {offsets = [0, 56], sizes = [64, 8], strides = [1, 1]} : vector<64x64xf32> to vector<64x8xf32>
    %107 = vector.extract_strided_slice %105 {offsets = [0, 24], sizes = [64, 8], strides = [1, 1]} : vector<64x48xf32> to vector<64x8xf32>
    %108 = arith.mulf %107, %106 : vector<64x8xf32>
    %109 = vector.extract_strided_slice %72 {offsets = [0, 32], sizes = [64, 8], strides = [1, 1]} : vector<64x48xf32> to vector<64x8xf32>
    %110 = arith.maximumf %78, %109 : vector<64x8xf32>
    %111 = arith.maximumf %110, %84 : vector<64x8xf32>
    %112 = tpu.concatenate %71, %76, %82, %88, %92, %96, %100, %104, %108, %111 in 1 : vector<64x96xf32>, vector<64x8xf32>, vector<64x8xf32>, vector<64x8xf32>, vector<64x8xf32>, vector<64x8xf32>, vector<64x8xf32>, vector<64x8xf32>, vector<64x8xf32>, vector<64x8xf32> -> vector<64x168xf32>
    %cst_27 = arith.constant dense<0.000000e+00> : vector<64x48xf32>
    %113 = tpu.matmul %112, %3, %cst_27 {dimension_numbers = #tpu.dot_dimension_numbers<[1], [0], [0], [1], [0, 0, 1, 1], [], []>} : vector<64x168xf32>, vector<168x48xf32>, vector<64x48xf32> -> vector<64x48xf32>
    %114 = vector.broadcast %4 : vector<1x48xf32> to vector<64x48xf32>
    %115 = arith.addf %113, %114 : vector<64x48xf32>
    %cst_28 = arith.constant 0.000000e+00 : f32
    %116 = vector.broadcast %cst_28 : f32 to vector<64x48xf32>
    %117 = arith.maximumf %115, %116 : vector<64x48xf32>
    %118 = arith.index_cast %64 : i32 to index
    %c0_29 = arith.constant 0 : index
    %119 = vector.load %arg8[%118, %c0_29] : memref<128x48xf32, #tpu.memory_space<vmem>>, vector<64x48xf32>
    tpu.vector_store %arg8[%118, %c0_29], %117 {strides = array<i32>} : memref<128x48xf32, #tpu.memory_space<vmem>>, vector<64x48xf32>,
    %c2_i32_30 = arith.constant 2 : i32
    return
  }
  func.func @transform_0(%arg0: i32) -> (i32, i32) {
    %c0_i32 = arith.constant 0 : i32
    %c0_i32_0 = arith.constant 0 : i32
    return %arg0, %c0_i32 : i32, i32
  }
  func.func @transform_1(%arg0: i32) -> (i32, i32) {
    %c0_i32 = arith.constant 0 : i32
    %c0_i32_0 = arith.constant 0 : i32
    %c0_i32_1 = arith.constant 0 : i32
    return %c0_i32, %c0_i32_0 : i32, i32
  }
  func.func @transform_2(%arg0: i32) -> (i32, i32) {
    %c0_i32 = arith.constant 0 : i32
    %c0_i32_0 = arith.constant 0 : i32
    %c0_i32_1 = arith.constant 0 : i32
    return %c0_i32, %c0_i32_0 : i32, i32
  }
  func.func @transform_3(%arg0: i32) -> (i32, i32) {
    %c0_i32 = arith.constant 0 : i32
    %c0_i32_0 = arith.constant 0 : i32
    %c0_i32_1 = arith.constant 0 : i32
    return %c0_i32, %c0_i32_0 : i32, i32
  }
  func.func @transform_4(%arg0: i32) -> (i32, i32) {
    %c0_i32 = arith.constant 0 : i32
    %c0_i32_0 = arith.constant 0 : i32
    %c0_i32_1 = arith.constant 0 : i32
    return %c0_i32, %c0_i32_0 : i32, i32
  }
  func.func @transform_5(%arg0: i32) -> (i32, i32) {
    %c0_i32 = arith.constant 0 : i32
    %c0_i32_0 = arith.constant 0 : i32
    %c0_i32_1 = arith.constant 0 : i32
    return %c0_i32, %c0_i32_0 : i32, i32
  }
  func.func @transform_6(%arg0: i32) -> (i32, i32) {
    %c0_i32 = arith.constant 0 : i32
    %c0_i32_0 = arith.constant 0 : i32
    %c0_i32_1 = arith.constant 0 : i32
    return %c0_i32, %c0_i32_0 : i32, i32
  }
  func.func @transform_7(%arg0: i32) -> (i32, i32) {
    %c0_i32 = arith.constant 0 : i32
    %c0_i32_0 = arith.constant 0 : i32
    return %arg0, %c0_i32 : i32, i32
  }
}

</mosaic_0001>

<llo_original>
// kernel: tpu_custom_call.1
$region0: #{tpu_custom_call.1}
  #allocation0 [shape = 'u32[]', space=smem, size = 0x4, offset = 0x4, fixed_abs, tag = 'smem constant byte address 0x4 - core index']
  #allocation1 [shape = 'u32[144,128]{1,0:T(1,128)}', space=vmem, size = 0x12000, scoped, tag = 'internal scratch']
  %s0 = inlined_call_operand.vmem [shape: f32[256,16], index: 0, kind: input, shape index: {}]
  %s1 = inlined_call_operand.vmem [shape: f32[16,96], index: 1, kind: input, shape index: {}]
  %s2 = inlined_call_operand.vmem [shape: f32[1,96], index: 2, kind: input, shape index: {}]
  %s3 = inlined_call_operand.vmem [shape: f32[1,96], index: 3, kind: input, shape index: {}]
  %s4 = inlined_call_operand.vmem [shape: f32[168,48], index: 4, kind: input, shape index: {}]
  %s5 = inlined_call_operand.vmem [shape: f32[1,48], index: 5, kind: input, shape index: {}]
  %s6 = inlined_call_operand.vmem [shape: f32[64,64], index: 6, kind: input, shape index: {}]
  %s7 = inlined_call_operand.vmem [shape: f32[256,48], index: 7, kind: output, shape index: {}]
  %s8 = sld [smem:[#allocation0]]
  $region61: #{tpu_custom_call.1} parent=0
    _
  %s10 = ssub.s32 1, %s8
  %s11 = scalar_select 0, %s10, %s8
  loop: start=0, step=1, limit=4
  $region2: #{tpu_custom_call.1} parent=0 // loop_pre_header
    _
  $region3: #{tpu_custom_call.1} parent=0 // loop_header
    %s13 = sphi 0, %s17
    %p14 = scmp.ge.s32.totalorder %s13, 4
    %s23 = sphi 0, %s25
    %s26 = sphi 0, %s23
    %s27 = sphi 0, %s26
    %s43 = sphi 0, %s27
    %s47 = sphi 0, %s47
    %s49 = sphi 0, %s47
    %s50 = sphi 0, %s49
    %s64 = sphi 0, %s50
    %s68 = sphi 0, %s68
    %s70 = sphi 0, %s68
    %s71 = sphi 0, %s70
    %s85 = sphi 0, %s71
    %s89 = sphi 0, %s89
    %s91 = sphi 0, %s89
    %s92 = sphi 0, %s91
    %s106 = sphi 0, %s92
    %s110 = sphi 0, %s110
    %s112 = sphi 0, %s110
    %s113 = sphi 0, %s112
    %s127 = sphi 0, %s113
    %s131 = sphi 0, %s131
    %s133 = sphi 0, %s131
    %s134 = sphi 0, %s133
    %s148 = sphi 0, %s134
    %s152 = sphi 0, %s152
    %s154 = sphi 0, %s152
    %s155 = sphi 0, %s154
    %s169 = sphi 0, %s155
    %s175 = sphi 0, %s177
    %s178 = sphi 0, %s175
    %s179 = sphi 0, %s178
    %s195 = sphi 0, %s179
  $region4: #{tpu_custom_call.1} parent=0 // loop_header_branch
    %16 = sbr.rel (%p14) target = $region8
  $region5: #{tpu_custom_call.1} parent=0 // loop_body
    %s18 = ssub.s32 %s13, 1
    %s19 = ssub.s32 %s13, 2
    %s20 = sadd.s32 %s13, 1
    %s21 = ssub.s32 %s13, %s20
    %p22 = scmp.eq.s32.totalorder %s21, 0
    %s24 = sadd.s32 %s23, 1
    %s25 = scalar_select %p22, %s23, %s24
    %p28 = pneg %p22
    %p29 = scmp.eq.s32.totalorder %s13, 1
    %p30 = por %p28, %p29
    %p31 = scmp.ne.s32.totalorder %s23, %s26
    %p32 = scmp.eq.s32.totalorder %s13, 0
    %p33 = por %p31, %p32
    %p34 = scmp.ne.s32.totalorder %s23, %s26
    %p35 = scmp.eq.s32.totalorder %s18, 1
    %p36 = por %p34, %p35
    %p37 = scmp.ne.s32.totalorder %s26, %s27
    %p38 = scmp.eq.s32.totalorder %s18, 0
    %p39 = por %p37, %p38
    %p40 = scmp.ne.s32.totalorder %s26, %s27
    %p41 = scmp.eq.s32.totalorder %s19, 1
    %p42 = por %p40, %p41
    %p44 = scmp.ne.s32.totalorder %s27, %s43
    %p45 = scmp.eq.s32.totalorder %s19, 0
    %p46 = por %p44, %p45
    %s48 = sadd.s32 %s47, 1
    %p51 = scmp.eq.s32.totalorder %s13, 1
    %p52 = scmp.ne.s32.totalorder %s47, %s49
    %p53 = scmp.eq.s32.totalorder %s13, 0
    %p54 = por %p52, %p53
    %p55 = scmp.ne.s32.totalorder %s47, %s49
    %p56 = scmp.eq.s32.totalorder %s18, 1
    %p57 = por %p55, %p56
    %p58 = scmp.ne.s32.totalorder %s49, %s50
    %p59 = scmp.eq.s32.totalorder %s18, 0
    %p60 = por %p58, %p59
    %p61 = scmp.ne.s32.totalorder %s49, %s50
    %p62 = scmp.eq.s32.totalorder %s19, 1
    %p63 = por %p61, %p62
    %p65 = scmp.ne.s32.totalorder %s50, %s64
    %p66 = scmp.eq.s32.totalorder %s19, 0
    %p67 = por %p65, %p66
    %s69 = sadd.s32 %s68, 1
    %p72 = scmp.eq.s32.totalorder %s13, 1
    %p73 = scmp.ne.s32.totalorder %s68, %s70
    %p74 = scmp.eq.s32.totalorder %s13, 0
    %p75 = por %p73, %p74
    %p76 = scmp.ne.s32.totalorder %s68, %s70
    %p77 = scmp.eq.s32.totalorder %s18, 1
    %p78 = por %p76, %p77
    %p79 = scmp.ne.s32.totalorder %s70, %s71
    %p80 = scmp.eq.s32.totalorder %s18, 0
    %p81 = por %p79, %p80
    %p82 = scmp.ne.s32.totalorder %s70, %s71
    %p83 = scmp.eq.s32.totalorder %s19, 1
    %p84 = por %p82, %p83
    %p86 = scmp.ne.s32.totalorder %s71, %s85
    %p87 = scmp.eq.s32.totalorder %s19, 0
    %p88 = por %p86, %p87
    %s90 = sadd.s32 %s89, 1
    %p93 = scmp.eq.s32.totalorder %s13, 1
    %p94 = scmp.ne.s32.totalorder %s89, %s91
    %p95 = scmp.eq.s32.totalorder %s13, 0
    %p96 = por %p94, %p95
    %p97 = scmp.ne.s32.totalorder %s89, %s91
    %p98 = scmp.eq.s32.totalorder %s18, 1
    %p99 = por %p97, %p98
    %p100 = scmp.ne.s32.totalorder %s91, %s92
    %p101 = scmp.eq.s32.totalorder %s18, 0
    %p102 = por %p100, %p101
    %p103 = scmp.ne.s32.totalorder %s91, %s92
    %p104 = scmp.eq.s32.totalorder %s19, 1
    %p105 = por %p103, %p104
    %p107 = scmp.ne.s32.totalorder %s92, %s106
    %p108 = scmp.eq.s32.totalorder %s19, 0
    %p109 = por %p107, %p108
    %s111 = sadd.s32 %s110, 1
    %p114 = scmp.eq.s32.totalorder %s13, 1
    %p115 = scmp.ne.s32.totalorder %s110, %s112
    %p116 = scmp.eq.s32.totalorder %s13, 0
    %p117 = por %p115, %p116
    %p118 = scmp.ne.s32.totalorder %s110, %s112
    %p119 = scmp.eq.s32.totalorder %s18, 1
    %p120 = por %p118, %p119
    %p121 = scmp.ne.s32.totalorder %s112, %s113
    %p122 = scmp.eq.s32.totalorder %s18, 0
    %p123 = por %p121, %p122
    %p124 = scmp.ne.s32.totalorder %s112, %s113
    %p125 = scmp.eq.s32.totalorder %s19, 1
    %p126 = por %p124, %p125
    %p128 = scmp.ne.s32.totalorder %s113, %s127
    %p129 = scmp.eq.s32.totalorder %s19, 0
    %p130 = por %p128, %p129
    %s132 = sadd.s32 %s131, 1
    %p135 = scmp.eq.s32.totalorder %s13, 1
    %p136 = scmp.ne.s32.totalorder %s131, %s133
    %p137 = scmp.eq.s32.totalorder %s13, 0
    %p138 = por %p136, %p137
    %p139 = scmp.ne.s32.totalorder %s131, %s133
    %p140 = scmp.eq.s32.totalorder %s18, 1
    %p141 = por %p139, %p140
    %p142 = scmp.ne.s32.totalorder %s133, %s134
    %p143 = scmp.eq.s32.totalorder %s18, 0
    %p144 = por %p142, %p143
    %p145 = scmp.ne.s32.totalorder %s133, %s134
    %p146 = scmp.eq.s32.totalorder %s19, 1
    %p147 = por %p145, %p146
    %p149 = scmp.ne.s32.totalorder %s134, %s148
    %p150 = scmp.eq.s32.totalorder %s19, 0
    %p151 = por %p149, %p150
    %s153 = sadd.s32 %s152, 1
    %p156 = scmp.eq.s32.totalorder %s13, 1
    %p157 = scmp.ne.s32.totalorder %s152, %s154
    %p158 = scmp.eq.s32.totalorder %s13, 0
    %p159 = por %p157, %p158
    %p160 = scmp.ne.s32.totalorder %s152, %s154
    %p161 = scmp.eq.s32.totalorder %s18, 1
    %p162 = por %p160, %p161
    %p163 = scmp.ne.s32.totalorder %s154, %s155
    %p164 = scmp.eq.s32.totalorder %s18, 0
    %p165 = por %p163, %p164
    %p166 = scmp.ne.s32.totalorder %s154, %s155
    %p167 = scmp.eq.s32.totalorder %s19, 1
    %p168 = por %p166, %p167
    %p170 = scmp.ne.s32.totalorder %s155, %s169
    %p171 = scmp.eq.s32.totalorder %s19, 0
    %p172 = por %p170, %p171
    %s173 = ssub.s32 %s13, %s20
    %p174 = scmp.eq.s32.totalorder %s173, 0
    %s176 = sadd.s32 %s175, 1
    %s177 = scalar_select %p174, %s175, %s176
    %p180 = pneg %p174
    %p181 = scmp.eq.s32.totalorder %s13, 1
    %p182 = por %p180, %p181
    %p183 = scmp.ne.s32.totalorder %s175, %s178
    %p184 = scmp.eq.s32.totalorder %s13, 0
    %p185 = por %p183, %p184
    %p186 = scmp.ne.s32.totalorder %s175, %s178
    %p187 = scmp.eq.s32.totalorder %s18, 1
    %p188 = por %p186, %p187
    %p189 = scmp.ne.s32.totalorder %s178, %s179
    %p190 = scmp.eq.s32.totalorder %s18, 0
    %p191 = por %p189, %p190
    %p192 = scmp.ne.s32.totalorder %s178, %s179
    %p193 = scmp.eq.s32.totalorder %s19, 1
    %p194 = por %p192, %p193
    %p196 = scmp.ne.s32.totalorder %s179, %s195
    %p197 = scmp.eq.s32.totalorder %s19, 0
    %p198 = por %p196, %p197
    %p199 = scmp.le.s32.totalorder 1, %s13
    %p200 = scmp.lt.s32.totalorder %s13, 3
    %p201 = pnand %p199, %p200
    %p202 = pneg %p201
    // Predicated region
    $region9: #{tpu_custom_call.1} parent=5 // pred_check
      _
    $region10: #{tpu_custom_call.1} parent=5 // pred_check_branch
      %204 = sbr.rel (%p201) target = $region12
    $region11: #{tpu_custom_call.1} parent=5 // pred_region
      %s205 = ssub.s32 %s13, 1
      // Predicated region
      $region13: #{tpu_custom_call.1} parent=11 // pred_check
        %p206 = pneg %p60
      $region14: #{tpu_custom_call.1} parent=11 // pred_check_branch
        %208 = sbr.rel (%p206) target = $region16
      $region15: #{tpu_custom_call.1} parent=11 // pred_region
        _
      $region16: #{tpu_custom_call.1} parent=11 // pred_fallthru
        _
      // Predicated region
      $region17: #{tpu_custom_call.1} parent=11 // pred_check
        %p209 = pneg %p81
      $region18: #{tpu_custom_call.1} parent=11 // pred_check_branch
        %211 = sbr.rel (%p209) target = $region20
      $region19: #{tpu_custom_call.1} parent=11 // pred_region
        _
      $region20: #{tpu_custom_call.1} parent=11 // pred_fallthru
        _
      // Predicated region
      $region21: #{tpu_custom_call.1} parent=11 // pred_check
        %p212 = pneg %p102
      $region22: #{tpu_custom_call.1} parent=11 // pred_check_branch
        %214 = sbr.rel (%p212) target = $region24
      $region23: #{tpu_custom_call.1} parent=11 // pred_region
        _
      $region24: #{tpu_custom_call.1} parent=11 // pred_fallthru
        _
      // Predicated region
      $region25: #{tpu_custom_call.1} parent=11 // pred_check
        %p215 = pneg %p123
      $region26: #{tpu_custom_call.1} parent=11 // pred_check_branch
        %217 = sbr.rel (%p215) target = $region28
      $region27: #{tpu_custom_call.1} parent=11 // pred_region
        _
      $region28: #{tpu_custom_call.1} parent=11 // pred_fallthru
        _
      // Predicated region
      $region29: #{tpu_custom_call.1} parent=11 // pred_check
        %p218 = pneg %p144
      $region30: #{tpu_custom_call.1} parent=11 // pred_check_branch
        %220 = sbr.rel (%p218) target = $region32
      $region31: #{tpu_custom_call.1} parent=11 // pred_region
        _
      $region32: #{tpu_custom_call.1} parent=11 // pred_fallthru
        _
      // Predicated region
      $region33: #{tpu_custom_call.1} parent=11 // pred_check
        %p221 = pneg %p165
      $region34: #{tpu_custom_call.1} parent=11 // pred_check_branch
        %223 = sbr.rel (%p221) target = $region36
      $region35: #{tpu_custom_call.1} parent=11 // pred_region
        _
      $region36: #{tpu_custom_call.1} parent=11 // pred_fallthru
        _
    $region12: #{tpu_custom_call.1} parent=5 // pred_fallthru
      _
    %p224 = scmp.lt.s32.totalorder %s13, 2
    // Predicated region
    $region37: #{tpu_custom_call.1} parent=5 // pred_check
      %p225 = pneg %p224
    $region38: #{tpu_custom_call.1} parent=5 // pred_check_branch
      %227 = sbr.rel (%p225) target = $region40
    $region39: #{tpu_custom_call.1} parent=5 // pred_region
      // Predicated region
      $region41: #{tpu_custom_call.1} parent=39 // pred_check
        %p228 = pneg %p33
      $region42: #{tpu_custom_call.1} parent=39 // pred_check_branch
        %230 = sbr.rel (%p228) target = $region44
      $region43: #{tpu_custom_call.1} parent=39 // pred_region
        %s231 = smul.u32 16, %s13
        %p232 = scmp.lt.s32.totalorder %s231, 31
        %s233 = scalar_select %p232, %s231, 31
        %s234 = smul.addr %s233, 8
        %s235 = scalar_lea.vmem %s0, %s234
        %s236 = smul.u32 16, %s13
      $region44: #{tpu_custom_call.1} parent=39 // pred_fallthru
        _
    $region40: #{tpu_custom_call.1} parent=5 // pred_fallthru
      _
    %p237 = scmp.le.s32.totalorder 1, %s13
    %p238 = scmp.lt.s32.totalorder %s13, 3
    %p239 = pnand %p237, %p238
    %p240 = pneg %p239
    // Predicated region
    $region45: #{tpu_custom_call.1} parent=5 // pred_check
      _
    $region46: #{tpu_custom_call.1} parent=5 // pred_check_branch
      %242 = sbr.rel (%p239) target = $region48
    $region47: #{tpu_custom_call.1} parent=5 // pred_region
      %s243 = ssub.s32 %s13, 1
      %s244 = smul.u32 16, %s18
      %p245 = scmp.lt.s32.totalorder %s244, 31
      %s246 = scalar_select %p245, %s244, 31
      %s247 = smul.addr %s246, 8
      %s248 = scalar_lea.vmem %s0, %s247
      %p249 = pneg %p39
      %p250 = pneg %p36
      %p251 = pneg %p60
      %p252 = pneg %p57
      %p253 = pneg %p81
      %p254 = pneg %p78
      %p255 = pneg %p102
      %p256 = pneg %p99
      %p257 = pneg %p123
      %p258 = pneg %p120
      %p259 = pneg %p144
      %p260 = pneg %p141
      %p261 = pneg %p165
      %p262 = pneg %p162
      %p263 = pneg %p191
      %p264 = pneg %p188
      %s265 = smul.u32 16, %s18
      %p266 = scmp.lt.s32.totalorder %s265, 31
      %s267 = scalar_select %p266, %s265, 31
      %s268 = smul.addr %s267, 8
      %s269 = scalar_lea.vmem %s7, %s268
      %s270 = smul.u32 16, %s18
      %p271 = scmp.lt.s32.totalorder %s270, 31
      %s272 = scalar_select %p271, %s270, 31
      %s273 = smul.addr %s272, 8
      %s274 = scalar_lea.vmem %s0, %s273
      %s275 = smul.u32 16, %s18
      %s276 = smul.u32 16, %s18
      %p277 = scmp.lt.s32.totalorder %s276, 31
      %s278 = scalar_select %p277, %s276, 31
      %s279 = smul.addr %s278, 8
      %s280 = scalar_lea.vmem %s7, %s279
      %s281 = smul.u32 16, %s18
      %v282 = vld [vmem:[%s1] sm:$0xff]
      %v283 = vld [vmem:[%s1 + $0x8] sm:$0xff]
      %v284 = vld [vmem:[%s2] sm:$0x1]
      %v285 = vld [vmem:[%s3] sm:$0x1]
      %v286 = vld [vmem:[%s4] sm:$0xff]
      %v287 = vld [vmem:[%s4 + $0x8] sm:$0xff]
      %v288 = vld [vmem:[%s4 + $0x10] sm:$0xff]
      %v289 = vld [vmem:[%s4 + $0x18] sm:$0xff]
      %v290 = vld [vmem:[%s4 + $0x20] sm:$0xff]
      %v291 = vld [vmem:[%s4 + $0x28] sm:$0xff]
      %v292 = vld [vmem:[%s4 + $0x30] sm:$0xff]
      %v293 = vld [vmem:[%s4 + $0x38] sm:$0xff]
      %v294 = vld [vmem:[%s4 + $0x40] sm:$0xff]
      %v295 = vld [vmem:[%s4 + $0x48] sm:$0xff]
      %v296 = vld [vmem:[%s4 + $0x50] sm:$0xff]
      %v297 = vld [vmem:[%s4 + $0x58] sm:$0xff]
      %v298 = vld [vmem:[%s4 + $0x60] sm:$0xff]
      %v299 = vld [vmem:[%s4 + $0x68] sm:$0xff]
      %v300 = vld [vmem:[%s4 + $0x70] sm:$0xff]
      %v301 = vld [vmem:[%s4 + $0x78] sm:$0xff]
      %v302 = vld [vmem:[%s4 + $0x80] sm:$0xff]
      %v303 = vld [vmem:[%s4 + $0x88] sm:$0xff]
      %v304 = vld [vmem:[%s4 + $0x90] sm:$0xff]
      %v305 = vld [vmem:[%s4 + $0x98] sm:$0xff]
      %v306 = vld [vmem:[%s4 + $0xa0] sm:$0xff]
      %v307 = vld [vmem:[%s5] sm:$0x1]
      %v308 = vld [vmem:[%s6] sm:$0xff]
      %v309 = vld [vmem:[%s6 + $0x8] sm:$0xff]
      %v310 = vld [vmem:[%s6 + $0x10] sm:$0xff]
      %v311 = vld [vmem:[%s6 + $0x18] sm:$0xff]
      %v312 = vld [vmem:[%s6 + $0x20] sm:$0xff]
      %v313 = vld [vmem:[%s6 + $0x28] sm:$0xff]
      %v314 = vld [vmem:[%s6 + $0x30] sm:$0xff]
      %v315 = vld [vmem:[%s6 + $0x38] sm:$0xff]
      %v316 = vld [vmem:[%s274] sm:$0xff]
      %v317 = vld [vmem:[%s274 + $0x8] sm:$0xff]
      %v318 = vld [vmem:[%s274 + $0x10] sm:$0xff]
      %v319 = vld [vmem:[%s274 + $0x18] sm:$0xff]
      %v320 = vld [vmem:[%s274 + $0x20] sm:$0xff]
      %v321 = vld [vmem:[%s274 + $0x28] sm:$0xff]
      %v322 = vld [vmem:[%s274 + $0x30] sm:$0xff]
      %v323 = vld [vmem:[%s274 + $0x38] sm:$0xff]
      %v325 = vlaneseq
      %v326 = vshrl.u32 %v325, 7
      %v327 = vsub.s32 0, %v326
      %v328 = vrot.slane %v284, %v327
      %vm330 = vcmask 130048
      %v332 = vsel %vm330, %v316, 0
      %v335 = vsel %vm330, %v317, 0
      %v338 = vsel %vm330, %v318, 0
      %v341 = vsel %vm330, %v319, 0
      %v344 = vsel %vm330, %v320, 0
      %v347 = vsel %vm330, %v321, 0
      %v350 = vsel %vm330, %v322, 0
      %v353 = vsel %vm330, %v323, 0
      %355 = vmatprep.subr.mxu0 0.0
      %356 = vmatpush1.msra.mxu0 0.0
      %357 = vmatprep.subr.mxu0 0.0
      %358 = vmatpush1.msra.mxu0 0.0
      %359 = vmatprep.subr.mxu0 0.0
      %360 = vmatpush1.msra.mxu0 0.0
      %361 = vmatprep.subr.mxu0 0.0
      %362 = vmatpush1.msra.mxu0 0.0
      %363 = vmatprep.subr.mxu0 0.0
      %364 = vmatpush1.msra.mxu0 0.0
      %365 = vmatprep.subr.mxu0 0.0
      %366 = vmatpush1.msra.mxu0 0.0
      %367 = vmatprep.subr.mxu0 0.0
      %368 = vmatpush1.msra.mxu0 0.0
      %369 = vmatprep.subr.mxu0 0.0
      %370 = vmatpush1.msra.mxu0 0.0
      %371 = vmatprep.subr.mxu0 0.0
      %372 = vmatpush1.msra.mxu0 0.0
      %373 = vmatprep.subr.mxu0 0.0
      %374 = vmatpush1.msra.mxu0 0.0
      %375 = vmatprep.subr.mxu0 0.0
      %376 = vmatpush1.msra.mxu0 0.0
      %377 = vmatprep.subr.mxu0 0.0
      %378 = vmatpush1.msra.mxu0 0.0
      %379 = vmatprep.subr.mxu0 0.0
      %380 = vmatpush1.msra.mxu0 0.0
      %381 = vmatprep.subr.mxu0 0.0
      %382 = vmatpush1.msra.mxu0 0.0
      %383 = vmatprep.subr.mxu0 0.0
      %384 = vmatpush1.msra.mxu0 %v283
      %385 = vmatprep.subr.mxu0 0.0
      %386 = vmatpush1.msra.mxu0 %v282
      %387 = vmatprep.subr.mxu0 0.0
      %388 = vmatpush2.msra.mxu0 0.0
      %389 = vmatprep.subr.mxu0 0.0
      %390 = vmatpush2.msra.mxu0 0.0
      %391 = vmatprep.subr.mxu0 0.0
      %392 = vmatpush2.msra.mxu0 0.0
      %393 = vmatprep.subr.mxu0 0.0
      %394 = vmatpush2.msra.mxu0 0.0
      %395 = vmatprep.subr.mxu0 0.0
      %396 = vmatpush2.msra.mxu0 0.0
      %397 = vmatprep.subr.mxu0 0.0
      %398 = vmatpush2.msra.mxu0 0.0
      %399 = vmatprep.subr.mxu0 0.0
      %400 = vmatpush2.msra.mxu0 0.0
      %401 = vmatprep.subr.mxu0 0.0
      %402 = vmatpush2.msra.mxu0 0.0
      %403 = vmatprep.subr.mxu0 0.0
      %404 = vmatpush2.msra.mxu0 0.0
      %405 = vmatprep.subr.mxu0 0.0
      %406 = vmatpush2.msra.mxu0 0.0
      %407 = vmatprep.subr.mxu0 0.0
      %408 = vmatpush2.msra.mxu0 0.0
      %409 = vmatprep.subr.mxu0 0.0
      %410 = vmatpush2.msra.mxu0 0.0
      %411 = vmatprep.subr.mxu0 0.0
      %412 = vmatpush2.msra.mxu0 0.0
      %413 = vmatprep.subr.mxu0 0.0
      %414 = vmatpush2.msra.mxu0 0.0
      %415 = vmatprep.subr.mxu0 0.0
      %416 = vmatpush2.msra.mxu0 0.0
      %417 = vmatprep.subr.mxu0 0.0
      %418 = vmatpush2.msra.mxu0 0.0
      %419 = vmatprep.mubr.f32.mxu0 0.0
      %420 = vmatmul.mubr.f32.gmra.mxu0 %v332
      %v421 = vpop.f32.mrf.mxu0
      %v422 = vadd.f32 %v328, %v421
      %v423 = vpop.f32.mrf.mxu0
      %424 = vmatprep.mubr.f32.mxu0 0.0
      %425 = vmatmul.mubr.f32.gmra.mxu0 %v335
      %v426 = vpop.f32.mrf.mxu0
      %v427 = vadd.f32 %v328, %v426
      %v428 = vpop.f32.mrf.mxu0
      %429 = vmatprep.mubr.f32.mxu0 0.0
      %430 = vmatmul.mubr.f32.gmra.mxu0 %v338
      %v431 = vpop.f32.mrf.mxu0
      %v432 = vadd.f32 %v328, %v431
      %v433 = vpop.f32.mrf.mxu0
      %434 = vmatprep.mubr.f32.mxu0 0.0
      %435 = vmatmul.mubr.f32.gmra.mxu0 %v341
      %v436 = vpop.f32.mrf.mxu0
      %v437 = vadd.f32 %v328, %v436
      %v438 = vpop.f32.mrf.mxu0
      %439 = vmatprep.mubr.f32.mxu0 0.0
      %440 = vmatmul.mubr.f32.gmra.mxu0 %v344
      %v441 = vpop.f32.mrf.mxu0
      %v442 = vadd.f32 %v328, %v441
      %v443 = vpop.f32.mrf.mxu0
      %444 = vmatprep.mubr.f32.mxu0 0.0
      %445 = vmatmul.mubr.f32.gmra.mxu0 %v347
      %v446 = vpop.f32.mrf.mxu0
      %v447 = vadd.f32 %v328, %v446
      %v448 = vpop.f32.mrf.mxu0
      %449 = vmatprep.mubr.f32.mxu0 0.0
      %450 = vmatmul.mubr.f32.gmra.mxu0 %v350
      %v451 = vpop.f32.mrf.mxu0
      %v452 = vadd.f32 %v328, %v451
      %v453 = vpop.f32.mrf.mxu0
      %454 = vmatprep.mubr.f32.mxu0 0.0
      %455 = vmatmul.mubr.f32.gmra.mxu0 %v353
      %v456 = vpop.f32.mrf.mxu0
      %v457 = vadd.f32 %v328, %v456
      %v458 = vpop.f32.mrf.mxu0
      %459 = vdwg.mxu0
      %v461 = vlaneseq
      %v462 = vshrl.u32 %v461, 7
      %v463 = vsub.s32 0, %v462
      %v464 = vrot.slane %v285, %v463
      %v466 = vmax.f32 %v422, %v464
      %v467 = vmax.f32 %v427, %v464
      %v468 = vmax.f32 %v432, %v464
      %v469 = vmax.f32 %v437, %v464
      %v470 = vmax.f32 %v442, %v464
      %v471 = vmax.f32 %v447, %v464
      %v472 = vmax.f32 %v452, %v464
      %v473 = vmax.f32 %v457, %v464
      %v474 = vrot.slane %v466, 1
      %v475 = vrot.slane %v467, 1
      %v476 = vrot.slane %v468, 1
      %v477 = vrot.slane %v469, 1
      %v478 = vrot.slane %v470, 1
      %v479 = vrot.slane %v471, 1
      %v480 = vrot.slane %v472, 1
      %v481 = vrot.slane %v473, 1
      %v482 = vlaneseq
      %v483 = vshrl.u32 %v482, 7
      %vm484 = vcmp.lt.s32.totalorder %v483, 7
      %v485 = vsel %vm484, %v480, %v481
      %v486 = vsel %vm484, %v479, %v480
      %v487 = vsel %vm484, %v478, %v479
      %v488 = vsel %vm484, %v477, %v478
      %v489 = vsel %vm484, %v476, %v477
      %v490 = vsel %vm484, %v475, %v476
      %v491 = vsel %vm484, %v474, %v475
      %v492 = vsel %vm484, %v481, %v474
      %v493 = vmul.f32 %v491, %v308
      %v494 = vmul.f32 %v490, %v309
      %v495 = vmul.f32 %v489, %v310
      %v496 = vmul.f32 %v488, %v311
      %v497 = vmul.f32 %v487, %v312
      %v498 = vmul.f32 %v486, %v313
      %v499 = vmul.f32 %v485, %v314
      %v500 = vmul.f32 %v492, %v315
      %509 = vrot.lane.b32.xlu0 %v308, 32
      %v510 = vpop.permute.xlu0 %509
      %511 = vrot.lane.b32.xlu0 %v309, 32
      %v512 = vpop.permute.xlu0 %511
      %513 = vrot.lane.b32.xlu0 %v310, 32
      %v514 = vpop.permute.xlu0 %513
      %515 = vrot.lane.b32.xlu0 %v311, 32
      %v516 = vpop.permute.xlu0 %515
      %517 = vrot.lane.b32.xlu0 %v312, 32
      %v518 = vpop.permute.xlu0 %517
      %519 = vrot.lane.b32.xlu0 %v313, 32
      %v520 = vpop.permute.xlu0 %519
      %521 = vrot.lane.b32.xlu0 %v314, 32
      %v522 = vpop.permute.xlu0 %521
      %523 = vrot.lane.b32.xlu0 %v315, 32
      %v524 = vpop.permute.xlu0 %523
      %v533 = vmul.f32 %v491, %v510
      %v534 = vmul.f32 %v490, %v512
      %v535 = vmul.f32 %v489, %v514
      %v536 = vmul.f32 %v488, %v516
      %v537 = vmul.f32 %v487, %v518
      %v538 = vmul.f32 %v486, %v520
      %v539 = vmul.f32 %v485, %v522
      %v540 = vmul.f32 %v492, %v524
      %v541 = vrot.slane %v466, 7
      %v542 = vrot.slane %v467, 7
      %v543 = vrot.slane %v468, 7
      %v544 = vrot.slane %v469, 7
      %v545 = vrot.slane %v470, 7
      %v546 = vrot.slane %v471, 7
      %v547 = vrot.slane %v472, 7
      %v548 = vrot.slane %v473, 7
      %vm549 = vcmp.lt.s32.totalorder %v483, 1
      %v550 = vsel %vm549, %v547, %v548
      %v551 = vsel %vm549, %v546, %v547
      %v552 = vsel %vm549, %v545, %v546
      %v553 = vsel %vm549, %v544, %v545
      %v554 = vsel %vm549, %v543, %v544
      %v555 = vsel %vm549, %v542, %v543
      %v556 = vsel %vm549, %v541, %v542
      %v557 = vsel %vm549, %v548, %v541
      %558 = vrot.lane.b32.xlu0 %v308, 120
      %v559 = vpop.permute.xlu0 %558
      %560 = vrot.lane.b32.xlu0 %v309, 120
      %v561 = vpop.permute.xlu0 %560
      %562 = vrot.lane.b32.xlu0 %v310, 120
      %v563 = vpop.permute.xlu0 %562
      %564 = vrot.lane.b32.xlu0 %v311, 120
      %v565 = vpop.permute.xlu0 %564
      %566 = vrot.lane.b32.xlu0 %v312, 120
      %v567 = vpop.permute.xlu0 %566
      %568 = vrot.lane.b32.xlu0 %v313, 120
      %v569 = vpop.permute.xlu0 %568
      %570 = vrot.lane.b32.xlu0 %v314, 120
      %v571 = vpop.permute.xlu0 %570
      %572 = vrot.lane.b32.xlu0 %v315, 120
      %v573 = vpop.permute.xlu0 %572
      %v582 = vmul.f32 %v557, %v559
      %v583 = vmul.f32 %v556, %v561
      %v584 = vmul.f32 %v555, %v563
      %v585 = vmul.f32 %v554, %v565
      %v586 = vmul.f32 %v553, %v567
      %v587 = vmul.f32 %v552, %v569
      %v588 = vmul.f32 %v551, %v571
      %v589 = vmul.f32 %v550, %v573
      %590 = vrot.lane.b32.xlu0 %v308, 24
      %v591 = vpop.permute.xlu0 %590
      %592 = vrot.lane.b32.xlu0 %v309, 24
      %v593 = vpop.permute.xlu0 %592
      %594 = vrot.lane.b32.xlu0 %v310, 24
      %v595 = vpop.permute.xlu0 %594
      %596 = vrot.lane.b32.xlu0 %v311, 24
      %v597 = vpop.permute.xlu0 %596
      %598 = vrot.lane.b32.xlu0 %v312, 24
      %v599 = vpop.permute.xlu0 %598
      %600 = vrot.lane.b32.xlu0 %v313, 24
      %v601 = vpop.permute.xlu0 %600
      %602 = vrot.lane.b32.xlu0 %v314, 24
      %v603 = vpop.permute.xlu0 %602
      %604 = vrot.lane.b32.xlu0 %v315, 24
      %v605 = vpop.permute.xlu0 %604
      %v614 = vmul.f32 %v557, %v591
      %v615 = vmul.f32 %v556, %v593
      %v616 = vmul.f32 %v555, %v595
      %v617 = vmul.f32 %v554, %v597
      %v618 = vmul.f32 %v553, %v599
      %v619 = vmul.f32 %v552, %v601
      %v620 = vmul.f32 %v551, %v603
      %v621 = vmul.f32 %v550, %v605
      %v622 = vrot.slane %v466, 2
      %v623 = vrot.slane %v467, 2
      %v624 = vrot.slane %v468, 2
      %v625 = vrot.slane %v469, 2
      %v626 = vrot.slane %v470, 2
      %v627 = vrot.slane %v471, 2
      %v628 = vrot.slane %v472, 2
      %v629 = vrot.slane %v473, 2
      %vm630 = vcmp.lt.s32.totalorder %v483, 6
      %v631 = vsel %vm630, %v628, %v629
      %v632 = vsel %vm630, %v627, %v628
      %v633 = vsel %vm630, %v626, %v627
      %v634 = vsel %vm630, %v625, %v626
      %v635 = vsel %vm630, %v624, %v625
      %v636 = vsel %vm630, %v623, %v624
      %v637 = vsel %vm630, %v622, %v623
      %v638 = vsel %vm630, %v629, %v622
      %v639 = vmul.f32 %v637, %v559
      %v640 = vmul.f32 %v636, %v561
      %v641 = vmul.f32 %v635, %v563
      %v642 = vmul.f32 %v634, %v565
      %v643 = vmul.f32 %v633, %v567
      %v644 = vmul.f32 %v632, %v569
      %v645 = vmul.f32 %v631, %v571
      %v646 = vmul.f32 %v638, %v573
      %v647 = vrot.slane %v466, 6
      %v648 = vrot.slane %v467, 6
      %v649 = vrot.slane %v468, 6
      %v650 = vrot.slane %v469, 6
      %v651 = vrot.slane %v470, 6
      %v652 = vrot.slane %v471, 6
      %v653 = vrot.slane %v472, 6
      %v654 = vrot.slane %v473, 6
      %vm655 = vcmp.lt.s32.totalorder %v483, 2
      %v656 = vsel %vm655, %v653, %v654
      %v657 = vsel %vm655, %v652, %v653
      %v658 = vsel %vm655, %v651, %v652
      %v659 = vsel %vm655, %v650, %v651
      %v660 = vsel %vm655, %v649, %v650
      %v661 = vsel %vm655, %v648, %v649
      %v662 = vsel %vm655, %v647, %v648
      %v663 = vsel %vm655, %v654, %v647
      %664 = vrot.lane.b32.xlu0 %v308, 112
      %v665 = vpop.permute.xlu0 %664
      %666 = vrot.lane.b32.xlu0 %v309, 112
      %v667 = vpop.permute.xlu0 %666
      %668 = vrot.lane.b32.xlu0 %v310, 112
      %v669 = vpop.permute.xlu0 %668
      %670 = vrot.lane.b32.xlu0 %v311, 112
      %v671 = vpop.permute.xlu0 %670
      %672 = vrot.lane.b32.xlu0 %v312, 112
      %v673 = vpop.permute.xlu0 %672
      %674 = vrot.lane.b32.xlu0 %v313, 112
      %v675 = vpop.permute.xlu0 %674
      %676 = vrot.lane.b32.xlu0 %v314, 112
      %v677 = vpop.permute.xlu0 %676
      %678 = vrot.lane.b32.xlu0 %v315, 112
      %v679 = vpop.permute.xlu0 %678
      %v688 = vmul.f32 %v663, %v665
      %v689 = vmul.f32 %v662, %v667
      %v690 = vmul.f32 %v661, %v669
      %v691 = vmul.f32 %v660, %v671
      %v692 = vmul.f32 %v659, %v673
      %v693 = vmul.f32 %v658, %v675
      %v694 = vmul.f32 %v657, %v677
      %v695 = vmul.f32 %v656, %v679
      %v696 = vrot.slane %v466, 3
      %v697 = vrot.slane %v467, 3
      %v698 = vrot.slane %v468, 3
      %v699 = vrot.slane %v469, 3
      %v700 = vrot.slane %v470, 3
      %v701 = vrot.slane %v471, 3
      %v702 = vrot.slane %v472, 3
      %v703 = vrot.slane %v473, 3
      %vm704 = vcmp.lt.s32.totalorder %v483, 5
      %v705 = vsel %vm704, %v702, %v703
      %v706 = vsel %vm704, %v701, %v702
      %v707 = vsel %vm704, %v700, %v701
      %v708 = vsel %vm704, %v699, %v700
      %v709 = vsel %vm704, %v698, %v699
      %v710 = vsel %vm704, %v697, %v698
      %v711 = vsel %vm704, %v696, %v697
      %v712 = vsel %vm704, %v703, %v696
      %v713 = vmul.f32 %v711, %v665
      %v714 = vmul.f32 %v710, %v667
      %v715 = vmul.f32 %v709, %v669
      %v716 = vmul.f32 %v708, %v671
      %v717 = vmul.f32 %v707, %v673
      %v718 = vmul.f32 %v706, %v675
      %v719 = vmul.f32 %v705, %v677
      %v720 = vmul.f32 %v712, %v679
      %v721 = vrot.slane %v466, 5
      %v722 = vrot.slane %v467, 5
      %v723 = vrot.slane %v468, 5
      %v724 = vrot.slane %v469, 5
      %v725 = vrot.slane %v470, 5
      %v726 = vrot.slane %v471, 5
      %v727 = vrot.slane %v472, 5
      %v728 = vrot.slane %v473, 5
      %vm729 = vcmp.lt.s32.totalorder %v483, 3
      %v730 = vsel %vm729, %v727, %v728
      %v731 = vsel %vm729, %v726, %v727
      %v732 = vsel %vm729, %v725, %v726
      %v733 = vsel %vm729, %v724, %v725
      %v734 = vsel %vm729, %v723, %v724
      %v735 = vsel %vm729, %v722, %v723
      %v736 = vsel %vm729, %v721, %v722
      %v737 = vsel %vm729, %v728, %v721
      %738 = vrot.lane.b32.xlu0 %v308, 104
      %v739 = vpop.permute.xlu0 %738
      %740 = vrot.lane.b32.xlu0 %v309, 104
      %v741 = vpop.permute.xlu0 %740
      %742 = vrot.lane.b32.xlu0 %v310, 104
      %v743 = vpop.permute.xlu0 %742
      %744 = vrot.lane.b32.xlu0 %v311, 104
      %v745 = vpop.permute.xlu0 %744
      %746 = vrot.lane.b32.xlu0 %v312, 104
      %v747 = vpop.permute.xlu0 %746
      %748 = vrot.lane.b32.xlu0 %v313, 104
      %v749 = vpop.permute.xlu0 %748
      %750 = vrot.lane.b32.xlu0 %v314, 104
      %v751 = vpop.permute.xlu0 %750
      %752 = vrot.lane.b32.xlu0 %v315, 104
      %v753 = vpop.permute.xlu0 %752
      %v762 = vmul.f32 %v737, %v739
      %v763 = vmul.f32 %v736, %v741
      %v764 = vmul.f32 %v735, %v743
      %v765 = vmul.f32 %v734, %v745
      %v766 = vmul.f32 %v733, %v747
      %v767 = vmul.f32 %v732, %v749
      %v768 = vmul.f32 %v731, %v751
      %v769 = vmul.f32 %v730, %v753
      %v770 = vrot.slane %v466, 4
      %v771 = vrot.slane %v467, 4
      %v772 = vrot.slane %v468, 4
      %v773 = vrot.slane %v469, 4
      %v774 = vrot.slane %v470, 4
      %v775 = vrot.slane %v471, 4
      %v776 = vrot.slane %v472, 4
      %v777 = vrot.slane %v473, 4
      %vm778 = vcmp.lt.s32.totalorder %v483, 4
      %v779 = vsel %vm778, %v776, %v777
      %v780 = vsel %vm778, %v775, %v776
      %v781 = vsel %vm778, %v774, %v775
      %v782 = vsel %vm778, %v773, %v774
      %v783 = vsel %vm778, %v772, %v773
      %v784 = vsel %vm778, %v771, %v772
      %v785 = vsel %vm778, %v770, %v771
      %v786 = vsel %vm778, %v777, %v770
      %v787 = vmul.f32 %v785, %v739
      %v788 = vmul.f32 %v784, %v741
      %v789 = vmul.f32 %v783, %v743
      %v790 = vmul.f32 %v782, %v745
      %v791 = vmul.f32 %v781, %v747
      %v792 = vmul.f32 %v780, %v749
      %v793 = vmul.f32 %v779, %v751
      %v794 = vmul.f32 %v786, %v753
      %795 = vrot.lane.b32.xlu0 %v308, 96
      %v796 = vpop.permute.xlu0 %795
      %797 = vrot.lane.b32.xlu0 %v309, 96
      %v798 = vpop.permute.xlu0 %797
      %799 = vrot.lane.b32.xlu0 %v310, 96
      %v800 = vpop.permute.xlu0 %799
      %801 = vrot.lane.b32.xlu0 %v311, 96
      %v802 = vpop.permute.xlu0 %801
      %803 = vrot.lane.b32.xlu0 %v312, 96
      %v804 = vpop.permute.xlu0 %803
      %805 = vrot.lane.b32.xlu0 %v313, 96
      %v806 = vpop.permute.xlu0 %805
      %807 = vrot.lane.b32.xlu0 %v314, 96
      %v808 = vpop.permute.xlu0 %807
      %809 = vrot.lane.b32.xlu0 %v315, 96
      %v810 = vpop.permute.xlu0 %809
      %v819 = vmul.f32 %v786, %v796
      %v820 = vmul.f32 %v785, %v798
      %v821 = vmul.f32 %v784, %v800
      %v822 = vmul.f32 %v783, %v802
      %v823 = vmul.f32 %v782, %v804
      %v824 = vmul.f32 %v781, %v806
      %v825 = vmul.f32 %v780, %v808
      %v826 = vmul.f32 %v779, %v810
      %v827 = vmax.f32 %v533, %v466
      %v828 = vmax.f32 %v534, %v467
      %v829 = vmax.f32 %v535, %v468
      %v830 = vmax.f32 %v536, %v469
      %v831 = vmax.f32 %v537, %v470
      %v832 = vmax.f32 %v538, %v471
      %v833 = vmax.f32 %v539, %v472
      %v834 = vmax.f32 %v540, %v473
      %v835 = vmax.f32 %v827, %v614
      %v836 = vmax.f32 %v828, %v615
      %v837 = vmax.f32 %v829, %v616
      %v838 = vmax.f32 %v830, %v617
      %v839 = vmax.f32 %v831, %v618
      %v840 = vmax.f32 %v832, %v619
      %v841 = vmax.f32 %v833, %v620
      %v842 = vmax.f32 %v834, %v621
      %851 = vrot.lane.b32.xlu0 %v493, 96
      %v852 = vpop.permute.xlu0 %851
      %853 = vrot.lane.b32.xlu0 %v494, 96
      %v854 = vpop.permute.xlu0 %853
      %855 = vrot.lane.b32.xlu0 %v495, 96
      %v856 = vpop.permute.xlu0 %855
      %857 = vrot.lane.b32.xlu0 %v496, 96
      %v858 = vpop.permute.xlu0 %857
      %859 = vrot.lane.b32.xlu0 %v497, 96
      %v860 = vpop.permute.xlu0 %859
      %861 = vrot.lane.b32.xlu0 %v498, 96
      %v862 = vpop.permute.xlu0 %861
      %863 = vrot.lane.b32.xlu0 %v499, 96
      %v864 = vpop.permute.xlu0 %863
      %865 = vrot.lane.b32.xlu0 %v500, 96
      %v866 = vpop.permute.xlu0 %865
      %883 = vrot.lane.b32.xlu0 %v582, 104
      %v884 = vpop.permute.xlu0 %883
      %885 = vrot.lane.b32.xlu0 %v583, 104
      %v886 = vpop.permute.xlu0 %885
      %887 = vrot.lane.b32.xlu0 %v584, 104
      %v888 = vpop.permute.xlu0 %887
      %889 = vrot.lane.b32.xlu0 %v585, 104
      %v890 = vpop.permute.xlu0 %889
      %891 = vrot.lane.b32.xlu0 %v586, 104
      %v892 = vpop.permute.xlu0 %891
      %893 = vrot.lane.b32.xlu0 %v587, 104
      %v894 = vpop.permute.xlu0 %893
      %895 = vrot.lane.b32.xlu0 %v588, 104
      %v896 = vpop.permute.xlu0 %895
      %897 = vrot.lane.b32.xlu0 %v589, 104
      %v898 = vpop.permute.xlu0 %897
      %915 = vrot.lane.b32.xlu0 %v639, 104
      %v916 = vpop.permute.xlu0 %915
      %917 = vrot.lane.b32.xlu0 %v640, 104
      %v918 = vpop.permute.xlu0 %917
      %919 = vrot.lane.b32.xlu0 %v641, 104
      %v920 = vpop.permute.xlu0 %919
      %921 = vrot.lane.b32.xlu0 %v642, 104
      %v922 = vpop.permute.xlu0 %921
      %923 = vrot.lane.b32.xlu0 %v643, 104
      %v924 = vpop.permute.xlu0 %923
      %925 = vrot.lane.b32.xlu0 %v644, 104
      %v926 = vpop.permute.xlu0 %925
      %927 = vrot.lane.b32.xlu0 %v645, 104
      %v928 = vpop.permute.xlu0 %927
      %929 = vrot.lane.b32.xlu0 %v646, 104
      %v930 = vpop.permute.xlu0 %929
      %947 = vrot.lane.b32.xlu0 %v688, 112
      %v948 = vpop.permute.xlu0 %947
      %949 = vrot.lane.b32.xlu0 %v689, 112
      %v950 = vpop.permute.xlu0 %949
      %951 = vrot.lane.b32.xlu0 %v690, 112
      %v952 = vpop.permute.xlu0 %951
      %953 = vrot.lane.b32.xlu0 %v691, 112
      %v954 = vpop.permute.xlu0 %953
      %955 = vrot.lane.b32.xlu0 %v692, 112
      %v956 = vpop.permute.xlu0 %955
      %957 = vrot.lane.b32.xlu0 %v693, 112
      %v958 = vpop.permute.xlu0 %957
      %959 = vrot.lane.b32.xlu0 %v694, 112
      %v960 = vpop.permute.xlu0 %959
      %961 = vrot.lane.b32.xlu0 %v695, 112
      %v962 = vpop.permute.xlu0 %961
      %979 = vrot.lane.b32.xlu0 %v713, 112
      %v980 = vpop.permute.xlu0 %979
      %981 = vrot.lane.b32.xlu0 %v714, 112
      %v982 = vpop.permute.xlu0 %981
      %983 = vrot.lane.b32.xlu0 %v715, 112
      %v984 = vpop.permute.xlu0 %983
      %985 = vrot.lane.b32.xlu0 %v716, 112
      %v986 = vpop.permute.xlu0 %985
      %987 = vrot.lane.b32.xlu0 %v717, 112
      %v988 = vpop.permute.xlu0 %987
      %989 = vrot.lane.b32.xlu0 %v718, 112
      %v990 = vpop.permute.xlu0 %989
      %991 = vrot.lane.b32.xlu0 %v719, 112
      %v992 = vpop.permute.xlu0 %991
      %993 = vrot.lane.b32.xlu0 %v720, 112
      %v994 = vpop.permute.xlu0 %993
      %1011 = vrot.lane.b32.xlu0 %v762, 120
      %v1012 = vpop.permute.xlu0 %1011
      %1013 = vrot.lane.b32.xlu0 %v763, 120
      %v1014 = vpop.permute.xlu0 %1013
      %1015 = vrot.lane.b32.xlu0 %v764, 120
      %v1016 = vpop.permute.xlu0 %1015
      %1017 = vrot.lane.b32.xlu0 %v765, 120
      %v1018 = vpop.permute.xlu0 %1017
      %1019 = vrot.lane.b32.xlu0 %v766, 120
      %v1020 = vpop.permute.xlu0 %1019
      %1021 = vrot.lane.b32.xlu0 %v767, 120
      %v1022 = vpop.permute.xlu0 %1021
      %1023 = vrot.lane.b32.xlu0 %v768, 120
      %v1024 = vpop.permute.xlu0 %1023
      %1025 = vrot.lane.b32.xlu0 %v769, 120
      %v1026 = vpop.permute.xlu0 %1025
      %1043 = vrot.lane.b32.xlu0 %v787, 120
      %v1044 = vpop.permute.xlu0 %1043
      %1045 = vrot.lane.b32.xlu0 %v788, 120
      %v1046 = vpop.permute.xlu0 %1045
      %1047 = vrot.lane.b32.xlu0 %v789, 120
      %v1048 = vpop.permute.xlu0 %1047
      %1049 = vrot.lane.b32.xlu0 %v790, 120
      %v1050 = vpop.permute.xlu0 %1049
      %1051 = vrot.lane.b32.xlu0 %v791, 120
      %v1052 = vpop.permute.xlu0 %1051
      %1053 = vrot.lane.b32.xlu0 %v792, 120
      %v1054 = vpop.permute.xlu0 %1053
      %1055 = vrot.lane.b32.xlu0 %v793, 120
      %v1056 = vpop.permute.xlu0 %1055
      %1057 = vrot.lane.b32.xlu0 %v794, 120
      %v1058 = vpop.permute.xlu0 %1057
      %vm1067 = vcmask 785408
      %v1068 = vsel %vm1067, %v466, %v852
      %v1069 = vsel %vm1067, %v467, %v854
      %v1070 = vsel %vm1067, %v468, %v856
      %v1071 = vsel %vm1067, %v469, %v858
      %v1072 = vsel %vm1067, %v470, %v860
      %v1073 = vsel %vm1067, %v471, %v862
      %v1074 = vsel %vm1067, %v472, %v864
      %v1075 = vsel %vm1067, %v473, %v866
      %vm1076 = vcmask 850944
      %v1077 = vsel %vm1076, %v1068, %v884
      %v1078 = vsel %vm1076, %v1069, %v886
      %v1079 = vsel %vm1076, %v1070, %v888
      %v1080 = vsel %vm1076, %v1071, %v890
      %v1081 = vsel %vm1076, %v1072, %v892
      %v1082 = vsel %vm1076, %v1073, %v894
      %v1083 = vsel %vm1076, %v1074, %v896
      %v1084 = vsel %vm1076, %v1075, %v898
      %vm1085 = vcmask 916480
      %v1086 = vsel %vm1085, %v1077, %v916
      %v1087 = vsel %vm1085, %v1078, %v918
      %v1088 = vsel %vm1085, %v1079, %v920
      %v1089 = vsel %vm1085, %v1080, %v922
      %v1090 = vsel %vm1085, %v1081, %v924
      %v1091 = vsel %vm1085, %v1082, %v926
      %v1092 = vsel %vm1085, %v1083, %v928
      %v1093 = vsel %vm1085, %v1084, %v930
      %vm1094 = vcmask 982016
      %v1095 = vsel %vm1094, %v1086, %v948
      %v1096 = vsel %vm1094, %v1087, %v950
      %v1097 = vsel %vm1094, %v1088, %v952
      %v1098 = vsel %vm1094, %v1089, %v954
      %v1099 = vsel %vm1094, %v1090, %v956
      %v1100 = vsel %vm1094, %v1091, %v958
      %v1101 = vsel %vm1094, %v1092, %v960
      %v1102 = vsel %vm1094, %v1093, %v962
      %vm1103 = vcmask 64512
      %v1104 = vsel %vm1103, %v980, %v1012
      %v1105 = vsel %vm1103, %v982, %v1014
      %v1106 = vsel %vm1103, %v984, %v1016
      %v1107 = vsel %vm1103, %v986, %v1018
      %v1108 = vsel %vm1103, %v988, %v1020
      %v1109 = vsel %vm1103, %v990, %v1022
      %v1110 = vsel %vm1103, %v992, %v1024
      %v1111 = vsel %vm1103, %v994, %v1026
      %v1112 = vsel %vm330, %v1104, %v1044
      %v1113 = vsel %vm330, %v1105, %v1046
      %v1114 = vsel %vm330, %v1106, %v1048
      %v1115 = vsel %vm330, %v1107, %v1050
      %v1116 = vsel %vm330, %v1108, %v1052
      %v1117 = vsel %vm330, %v1109, %v1054
      %v1118 = vsel %vm330, %v1110, %v1056
      %v1119 = vsel %vm330, %v1111, %v1058
      %vm1120 = vcmask 195584
      %v1121 = vsel %vm1120, %v1112, %v819
      %v1122 = vsel %vm1120, %v1113, %v820
      %v1123 = vsel %vm1120, %v1114, %v821
      %v1124 = vsel %vm1120, %v1115, %v822
      %v1125 = vsel %vm1120, %v1116, %v823
      %v1126 = vsel %vm1120, %v1117, %v824
      %v1127 = vsel %vm1120, %v1118, %v825
      %v1128 = vsel %vm1120, %v1119, %v826
      %vm1129 = vcmask 261120
      %v1130 = vsel %vm1129, %v1121, %v835
      %v1131 = vsel %vm1129, %v1122, %v836
      %v1132 = vsel %vm1129, %v1123, %v837
      %v1133 = vsel %vm1129, %v1124, %v838
      %v1134 = vsel %vm1129, %v1125, %v839
      %v1135 = vsel %vm1129, %v1126, %v840
      %v1136 = vsel %vm1129, %v1127, %v841
      %v1137 = vsel %vm1129, %v1128, %v842
      %v1139 = vlaneseq
      %v1140 = vshrl.u32 %v1139, 7
      %v1141 = vsub.s32 0, %v1140
      %v1142 = vrot.slane %v307, %v1141
      %vm1144 = vcmask 326656
      %v1146 = vsel %vm1144, %v1130, 0
      %v1149 = vsel %vm1144, %v1131, 0
      %v1152 = vsel %vm1144, %v1132, 0
      %v1155 = vsel %vm1144, %v1133, 0
      %v1158 = vsel %vm1144, %v1134, 0
      %v1161 = vsel %vm1144, %v1135, 0
      %v1164 = vsel %vm1144, %v1136, 0
      %v1167 = vsel %vm1144, %v1137, 0
      %1169 = vmatprep.subr.mxu0 0.0
      %1170 = vmatpush1.msra.mxu0 %v301
      %1171 = vmatprep.subr.mxu0 0.0
      %1172 = vmatpush1.msra.mxu0 %v300
      %1173 = vmatprep.subr.mxu0 0.0
      %1174 = vmatpush1.msra.mxu0 %v299
      %1175 = vmatprep.subr.mxu0 0.0
      %1176 = vmatpush1.msra.mxu0 %v298
      %1177 = vmatprep.subr.mxu0 0.0
      %1178 = vmatpush1.msra.mxu0 %v297
      %1179 = vmatprep.subr.mxu0 0.0
      %1180 = vmatpush1.msra.mxu0 %v296
      %1181 = vmatprep.subr.mxu0 0.0
      %1182 = vmatpush1.msra.mxu0 %v295
      %1183 = vmatprep.subr.mxu0 0.0
      %1184 = vmatpush1.msra.mxu0 %v294
      %1185 = vmatprep.subr.mxu0 0.0
      %1186 = vmatpush1.msra.mxu0 %v293
      %1187 = vmatprep.subr.mxu0 0.0
      %1188 = vmatpush1.msra.mxu0 %v292
      %1189 = vmatprep.subr.mxu0 0.0
      %1190 = vmatpush1.msra.mxu0 %v291
      %1191 = vmatprep.subr.mxu0 0.0
      %1192 = vmatpush1.msra.mxu0 %v290
      %1193 = vmatprep.subr.mxu0 0.0
      %1194 = vmatpush1.msra.mxu0 %v289
      %1195 = vmatprep.subr.mxu0 0.0
      %1196 = vmatpush1.msra.mxu0 %v288
      %1197 = vmatprep.subr.mxu0 0.0
      %1198 = vmatpush1.msra.mxu0 %v287
      %1199 = vmatprep.subr.mxu0 0.0
      %1200 = vmatpush1.msra.mxu0 %v286
      %1201 = vmatprep.subr.mxu0 0.0
      %1202 = vmatpush2.msra.mxu0 0.0
      %1203 = vmatprep.subr.mxu0 0.0
      %1204 = vmatpush2.msra.mxu0 0.0
      %1205 = vmatprep.subr.mxu0 0.0
      %1206 = vmatpush2.msra.mxu0 0.0
      %1207 = vmatprep.subr.mxu0 0.0
      %1208 = vmatpush2.msra.mxu0 0.0
      %1209 = vmatprep.subr.mxu0 0.0
      %1210 = vmatpush2.msra.mxu0 0.0
      %1211 = vmatprep.subr.mxu0 0.0
      %1212 = vmatpush2.msra.mxu0 0.0
      %1213 = vmatprep.subr.mxu0 0.0
      %1214 = vmatpush2.msra.mxu0 0.0
      %1215 = vmatprep.subr.mxu0 0.0
      %1216 = vmatpush2.msra.mxu0 0.0
      %1217 = vmatprep.subr.mxu0 0.0
      %1218 = vmatpush2.msra.mxu0 0.0
      %1219 = vmatprep.subr.mxu0 0.0
      %1220 = vmatpush2.msra.mxu0 0.0
      %1221 = vmatprep.subr.mxu0 0.0
      %1222 = vmatpush2.msra.mxu0 0.0
      %1223 = vmatprep.subr.mxu0 0.0
      %1224 = vmatpush2.msra.mxu0 %v306
      %1225 = vmatprep.subr.mxu0 0.0
      %1226 = vmatpush2.msra.mxu0 %v305
      %1227 = vmatprep.subr.mxu0 0.0
      %1228 = vmatpush2.msra.mxu0 %v304
      %1229 = vmatprep.subr.mxu0 0.0
      %1230 = vmatpush2.msra.mxu0 %v303
      %1231 = vmatprep.subr.mxu0 0.0
      %1232 = vmatpush2.msra.mxu0 %v302
      %1233 = vmatprep.mubr.f32.mxu0 %v1146
      %1234 = vmatmul.mubr.f32.gmra.mxu0 %v1095
      %v1235 = vpop.f32.mrf.mxu0
      %v1236 = vadd.f32 %v1142, %v1235
      %v1237 = vpop.f32.mrf.mxu0
      %1238 = vmatprep.mubr.f32.mxu0 %v1149
      %1239 = vmatmul.mubr.f32.gmra.mxu0 %v1096
      %v1240 = vpop.f32.mrf.mxu0
      %v1241 = vadd.f32 %v1142, %v1240
      %v1242 = vpop.f32.mrf.mxu0
      %1243 = vmatprep.mubr.f32.mxu0 %v1152
      %1244 = vmatmul.mubr.f32.gmra.mxu0 %v1097
      %v1245 = vpop.f32.mrf.mxu0
      %v1246 = vadd.f32 %v1142, %v1245
      %v1247 = vpop.f32.mrf.mxu0
      %1248 = vmatprep.mubr.f32.mxu0 %v1155
      %1249 = vmatmul.mubr.f32.gmra.mxu0 %v1098
      %v1250 = vpop.f32.mrf.mxu0
      %v1251 = vadd.f32 %v1142, %v1250
      %v1252 = vpop.f32.mrf.mxu0
      %1253 = vmatprep.mubr.f32.mxu0 %v1158
      %1254 = vmatmul.mubr.f32.gmra.mxu0 %v1099
      %v1255 = vpop.f32.mrf.mxu0
      %v1256 = vadd.f32 %v1142, %v1255
      %v1257 = vpop.f32.mrf.mxu0
      %1258 = vmatprep.mubr.f32.mxu0 %v1161
      %1259 = vmatmul.mubr.f32.gmra.mxu0 %v1100
      %v1260 = vpop.f32.mrf.mxu0
      %v1261 = vadd.f32 %v1142, %v1260
      %v1262 = vpop.f32.mrf.mxu0
      %1263 = vmatprep.mubr.f32.mxu0 %v1164
      %1264 = vmatmul.mubr.f32.gmra.mxu0 %v1101
      %v1265 = vpop.f32.mrf.mxu0
      %v1266 = vadd.f32 %v1142, %v1265
      %v1267 = vpop.f32.mrf.mxu0
      %1268 = vmatprep.mubr.f32.mxu0 %v1167
      %1269 = vmatmul.mubr.f32.gmra.mxu0 %v1102
      %v1270 = vpop.f32.mrf.mxu0
      %v1271 = vadd.f32 %v1142, %v1270
      %v1272 = vpop.f32.mrf.mxu0
      %1273 = vdwg.mxu0
      %v1274 = vmax.f32 %v1236, 0.0
      %v1275 = vmax.f32 %v1241, 0.0
      %v1276 = vmax.f32 %v1246, 0.0
      %v1277 = vmax.f32 %v1251, 0.0
      %v1278 = vmax.f32 %v1256, 0.0
      %v1279 = vmax.f32 %v1261, 0.0
      %v1280 = vmax.f32 %v1266, 0.0
      %v1281 = vmax.f32 %v1271, 0.0
      %vm1282 = vcmask 392192
      %1283 = vst.msk [vmem:[%s280] sm:$0xff] %vm1282, %v1274
      %1284 = vst.msk [vmem:[%s280 + $0x8] sm:$0xff] %vm1282, %v1275
      %1285 = vst.msk [vmem:[%s280 + $0x10] sm:$0xff] %vm1282, %v1276
      %1286 = vst.msk [vmem:[%s280 + $0x18] sm:$0xff] %vm1282, %v1277
      %1287 = vst.msk [vmem:[%s280 + $0x20] sm:$0xff] %vm1282, %v1278
      %1288 = vst.msk [vmem:[%s280 + $0x28] sm:$0xff] %vm1282, %v1279
      %1289 = vst.msk [vmem:[%s280 + $0x30] sm:$0xff] %vm1282, %v1280
      %1290 = vst.msk [vmem:[%s280 + $0x38] sm:$0xff] %vm1282, %v1281
      %s1291 = scalar_lea.vmem %s274, 64
      %v1292 = vld [vmem:[%s1291] sm:$0xff]
      %v1293 = vld [vmem:[%s1291 + $0x8] sm:$0xff]
      %v1294 = vld [vmem:[%s1291 + $0x10] sm:$0xff]
      %v1295 = vld [vmem:[%s1291 + $0x18] sm:$0xff]
      %v1296 = vld [vmem:[%s1291 + $0x20] sm:$0xff]
      %v1297 = vld [vmem:[%s1291 + $0x28] sm:$0xff]
      %v1298 = vld [vmem:[%s1291 + $0x30] sm:$0xff]
      %v1299 = vld [vmem:[%s1291 + $0x38] sm:$0xff]
      %v1301 = vsel %vm330, %v1292, 0
      %v1304 = vsel %vm330, %v1293, 0
      %v1307 = vsel %vm330, %v1294, 0
      %v1310 = vsel %vm330, %v1295, 0
      %v1313 = vsel %vm330, %v1296, 0
      %v1316 = vsel %vm330, %v1297, 0
      %v1319 = vsel %vm330, %v1298, 0
      %v1322 = vsel %vm330, %v1299, 0
      %1324 = vmatprep.subr.mxu0 0.0
      %1325 = vmatpush1.msra.mxu0 0.0
      %1326 = vmatprep.subr.mxu0 0.0
      %1327 = vmatpush1.msra.mxu0 0.0
      %1328 = vmatprep.subr.mxu0 0.0
      %1329 = vmatpush1.msra.mxu0 0.0
      %1330 = vmatprep.subr.mxu0 0.0
      %1331 = vmatpush1.msra.mxu0 0.0
      %1332 = vmatprep.subr.mxu0 0.0
      %1333 = vmatpush1.msra.mxu0 0.0
      %1334 = vmatprep.subr.mxu0 0.0
      %1335 = vmatpush1.msra.mxu0 0.0
      %1336 = vmatprep.subr.mxu0 0.0
      %1337 = vmatpush1.msra.mxu0 0.0
      %1338 = vmatprep.subr.mxu0 0.0
      %1339 = vmatpush1.msra.mxu0 0.0
      %1340 = vmatprep.subr.mxu0 0.0
      %1341 = vmatpush1.msra.mxu0 0.0
      %1342 = vmatprep.subr.mxu0 0.0
      %1343 = vmatpush1.msra.mxu0 0.0
      %1344 = vmatprep.subr.mxu0 0.0
      %1345 = vmatpush1.msra.mxu0 0.0
      %1346 = vmatprep.subr.mxu0 0.0
      %1347 = vmatpush1.msra.mxu0 0.0
      %1348 = vmatprep.subr.mxu0 0.0
      %1349 = vmatpush1.msra.mxu0 0.0
      %1350 = vmatprep.subr.mxu0 0.0
      %1351 = vmatpush1.msra.mxu0 0.0
      %1352 = vmatprep.subr.mxu0 0.0
      %1353 = vmatpush1.msra.mxu0 %v283
      %1354 = vmatprep.subr.mxu0 0.0
      %1355 = vmatpush1.msra.mxu0 %v282
      %1356 = vmatprep.subr.mxu0 0.0
      %1357 = vmatpush2.msra.mxu0 0.0
      %1358 = vmatprep.subr.mxu0 0.0
      %1359 = vmatpush2.msra.mxu0 0.0
      %1360 = vmatprep.subr.mxu0 0.0
      %1361 = vmatpush2.msra.mxu0 0.0
      %1362 = vmatprep.subr.mxu0 0.0
      %1363 = vmatpush2.msra.mxu0 0.0
      %1364 = vmatprep.subr.mxu0 0.0
      %1365 = vmatpush2.msra.mxu0 0.0
      %1366 = vmatprep.subr.mxu0 0.0
      %1367 = vmatpush2.msra.mxu0 0.0
      %1368 = vmatprep.subr.mxu0 0.0
      %1369 = vmatpush2.msra.mxu0 0.0
      %1370 = vmatprep.subr.mxu0 0.0
      %1371 = vmatpush2.msra.mxu0 0.0
      %1372 = vmatprep.subr.mxu0 0.0
      %1373 = vmatpush2.msra.mxu0 0.0
      %1374 = vmatprep.subr.mxu0 0.0
      %1375 = vmatpush2.msra.mxu0 0.0
      %1376 = vmatprep.subr.mxu0 0.0
      %1377 = vmatpush2.msra.mxu0 0.0
      %1378 = vmatprep.subr.mxu0 0.0
      %1379 = vmatpush2.msra.mxu0 0.0
      %1380 = vmatprep.subr.mxu0 0.0
      %1381 = vmatpush2.msra.mxu0 0.0
      %1382 = vmatprep.subr.mxu0 0.0
      %1383 = vmatpush2.msra.mxu0 0.0
      %1384 = vmatprep.subr.mxu0 0.0
      %1385 = vmatpush2.msra.mxu0 0.0
      %1386 = vmatprep.subr.mxu0 0.0
      %1387 = vmatpush2.msra.mxu0 0.0
      %1388 = vmatprep.mubr.f32.mxu0 0.0
      %1389 = vmatmul.mubr.f32.gmra.mxu0 %v1301
      %v1390 = vpop.f32.mrf.mxu0
      %v1391 = vadd.f32 %v328, %v1390
      %v1392 = vpop.f32.mrf.mxu0
      %1393 = vmatprep.mubr.f32.mxu0 0.0
      %1394 = vmatmul.mubr.f32.gmra.mxu0 %v1304
      %v1395 = vpop.f32.mrf.mxu0
      %v1396 = vadd.f32 %v328, %v1395
      %v1397 = vpop.f32.mrf.mxu0
      %1398 = vmatprep.mubr.f32.mxu0 0.0
      %1399 = vmatmul.mubr.f32.gmra.mxu0 %v1307
      %v1400 = vpop.f32.mrf.mxu0
      %v1401 = vadd.f32 %v328, %v1400
      %v1402 = vpop.f32.mrf.mxu0
      %1403 = vmatprep.mubr.f32.mxu0 0.0
      %1404 = vmatmul.mubr.f32.gmra.mxu0 %v1310
      %v1405 = vpop.f32.mrf.mxu0
      %v1406 = vadd.f32 %v328, %v1405
      %v1407 = vpop.f32.mrf.mxu0
      %1408 = vmatprep.mubr.f32.mxu0 0.0
      %1409 = vmatmul.mubr.f32.gmra.mxu0 %v1313
      %v1410 = vpop.f32.mrf.mxu0
      %v1411 = vadd.f32 %v328, %v1410
      %v1412 = vpop.f32.mrf.mxu0
      %1413 = vmatprep.mubr.f32.mxu0 0.0
      %1414 = vmatmul.mubr.f32.gmra.mxu0 %v1316
      %v1415 = vpop.f32.mrf.mxu0
      %v1416 = vadd.f32 %v328, %v1415
      %v1417 = vpop.f32.mrf.mxu0
      %1418 = vmatprep.mubr.f32.mxu0 0.0
      %1419 = vmatmul.mubr.f32.gmra.mxu0 %v1319
      %v1420 = vpop.f32.mrf.mxu0
      %v1421 = vadd.f32 %v328, %v1420
      %v1422 = vpop.f32.mrf.mxu0
      %1423 = vmatprep.mubr.f32.mxu0 0.0
      %1424 = vmatmul.mubr.f32.gmra.mxu0 %v1322
      %v1425 = vpop.f32.mrf.mxu0
      %v1426 = vadd.f32 %v328, %v1425
      %v1427 = vpop.f32.mrf.mxu0
      %1428 = vdwg.mxu0
      %v1429 = vmax.f32 %v1391, %v464
      %v1430 = vmax.f32 %v1396, %v464
      %v1431 = vmax.f32 %v1401, %v464
      %v1432 = vmax.f32 %v1406, %v464
      %v1433 = vmax.f32 %v1411, %v464
      %v1434 = vmax.f32 %v1416, %v464
      %v1435 = vmax.f32 %v1421, %v464
      %v1436 = vmax.f32 %v1426, %v464
      %v1437 = vrot.slane %v1429, 1
      %v1438 = vrot.slane %v1430, 1
      %v1439 = vrot.slane %v1431, 1
      %v1440 = vrot.slane %v1432, 1
      %v1441 = vrot.slane %v1433, 1
      %v1442 = vrot.slane %v1434, 1
      %v1443 = vrot.slane %v1435, 1
      %v1444 = vrot.slane %v1436, 1
      %v1445 = vsel %vm484, %v1443, %v1444
      %v1446 = vsel %vm484, %v1442, %v1443
      %v1447 = vsel %vm484, %v1441, %v1442
      %v1448 = vsel %vm484, %v1440, %v1441
      %v1449 = vsel %vm484, %v1439, %v1440
      %v1450 = vsel %vm484, %v1438, %v1439
      %v1451 = vsel %vm484, %v1437, %v1438
      %v1452 = vsel %vm484, %v1444, %v1437
      %v1453 = vmul.f32 %v1451, %v308
      %v1454 = vmul.f32 %v1450, %v309
      %v1455 = vmul.f32 %v1449, %v310
      %v1456 = vmul.f32 %v1448, %v311
      %v1457 = vmul.f32 %v1447, %v312
      %v1458 = vmul.f32 %v1446, %v313
      %v1459 = vmul.f32 %v1445, %v314
      %v1460 = vmul.f32 %v1452, %v315
      %v1461 = vmul.f32 %v1451, %v510
      %v1462 = vmul.f32 %v1450, %v512
      %v1463 = vmul.f32 %v1449, %v514
      %v1464 = vmul.f32 %v1448, %v516
      %v1465 = vmul.f32 %v1447, %v518
      %v1466 = vmul.f32 %v1446, %v520
      %v1467 = vmul.f32 %v1445, %v522
      %v1468 = vmul.f32 %v1452, %v524
      %v1469 = vrot.slane %v1429, 7
      %v1470 = vrot.slane %v1430, 7
      %v1471 = vrot.slane %v1431, 7
      %v1472 = vrot.slane %v1432, 7
      %v1473 = vrot.slane %v1433, 7
      %v1474 = vrot.slane %v1434, 7
      %v1475 = vrot.slane %v1435, 7
      %v1476 = vrot.slane %v1436, 7
      %v1477 = vsel %vm549, %v1475, %v1476
      %v1478 = vsel %vm549, %v1474, %v1475
      %v1479 = vsel %vm549, %v1473, %v1474
      %v1480 = vsel %vm549, %v1472, %v1473
      %v1481 = vsel %vm549, %v1471, %v1472
      %v1482 = vsel %vm549, %v1470, %v1471
      %v1483 = vsel %vm549, %v1469, %v1470
      %v1484 = vsel %vm549, %v1476, %v1469
      %v1485 = vmul.f32 %v1484, %v559
      %v1486 = vmul.f32 %v1483, %v561
      %v1487 = vmul.f32 %v1482, %v563
      %v1488 = vmul.f32 %v1481, %v565
      %v1489 = vmul.f32 %v1480, %v567
      %v1490 = vmul.f32 %v1479, %v569
      %v1491 = vmul.f32 %v1478, %v571
      %v1492 = vmul.f32 %v1477, %v573
      %v1493 = vmul.f32 %v1484, %v591
      %v1494 = vmul.f32 %v1483, %v593
      %v1495 = vmul.f32 %v1482, %v595
      %v1496 = vmul.f32 %v1481, %v597
      %v1497 = vmul.f32 %v1480, %v599
      %v1498 = vmul.f32 %v1479, %v601
      %v1499 = vmul.f32 %v1478, %v603
      %v1500 = vmul.f32 %v1477, %v605
      %v1501 = vrot.slane %v1429, 2
      %v1502 = vrot.slane %v1430, 2
      %v1503 = vrot.slane %v1431, 2
      %v1504 = vrot.slane %v1432, 2
      %v1505 = vrot.slane %v1433, 2
      %v1506 = vrot.slane %v1434, 2
      %v1507 = vrot.slane %v1435, 2
      %v1508 = vrot.slane %v1436, 2
      %v1509 = vsel %vm630, %v1507, %v1508
      %v1510 = vsel %vm630, %v1506, %v1507
      %v1511 = vsel %vm630, %v1505, %v1506
      %v1512 = vsel %vm630, %v1504, %v1505
      %v1513 = vsel %vm630, %v1503, %v1504
      %v1514 = vsel %vm630, %v1502, %v1503
      %v1515 = vsel %vm630, %v1501, %v1502
      %v1516 = vsel %vm630, %v1508, %v1501
      %v1517 = vmul.f32 %v1515, %v559
      %v1518 = vmul.f32 %v1514, %v561
      %v1519 = vmul.f32 %v1513, %v563
      %v1520 = vmul.f32 %v1512, %v565
      %v1521 = vmul.f32 %v1511, %v567
      %v1522 = vmul.f32 %v1510, %v569
      %v1523 = vmul.f32 %v1509, %v571
      %v1524 = vmul.f32 %v1516, %v573
      %v1525 = vrot.slane %v1429, 6
      %v1526 = vrot.slane %v1430, 6
      %v1527 = vrot.slane %v1431, 6
      %v1528 = vrot.slane %v1432, 6
      %v1529 = vrot.slane %v1433, 6
      %v1530 = vrot.slane %v1434, 6
      %v1531 = vrot.slane %v1435, 6
      %v1532 = vrot.slane %v1436, 6
      %v1533 = vsel %vm655, %v1531, %v1532
      %v1534 = vsel %vm655, %v1530, %v1531
      %v1535 = vsel %vm655, %v1529, %v1530
      %v1536 = vsel %vm655, %v1528, %v1529
      %v1537 = vsel %vm655, %v1527, %v1528
      %v1538 = vsel %vm655, %v1526, %v1527
      %v1539 = vsel %vm655, %v1525, %v1526
      %v1540 = vsel %vm655, %v1532, %v1525
      %v1541 = vmul.f32 %v1540, %v665
      %v1542 = vmul.f32 %v1539, %v667
      %v1543 = vmul.f32 %v1538, %v669
      %v1544 = vmul.f32 %v1537, %v671
      %v1545 = vmul.f32 %v1536, %v673
      %v1546 = vmul.f32 %v1535, %v675
      %v1547 = vmul.f32 %v1534, %v677
      %v1548 = vmul.f32 %v1533, %v679
      %v1549 = vrot.slane %v1429, 3
      %v1550 = vrot.slane %v1430, 3
      %v1551 = vrot.slane %v1431, 3
      %v1552 = vrot.slane %v1432, 3
      %v1553 = vrot.slane %v1433, 3
      %v1554 = vrot.slane %v1434, 3
      %v1555 = vrot.slane %v1435, 3
      %v1556 = vrot.slane %v1436, 3
      %v1557 = vsel %vm704, %v1555, %v1556
      %v1558 = vsel %vm704, %v1554, %v1555
      %v1559 = vsel %vm704, %v1553, %v1554
      %v1560 = vsel %vm704, %v1552, %v1553
      %v1561 = vsel %vm704, %v1551, %v1552
      %v1562 = vsel %vm704, %v1550, %v1551
      %v1563 = vsel %vm704, %v1549, %v1550
      %v1564 = vsel %vm704, %v1556, %v1549
      %v1565 = vmul.f32 %v1563, %v665
      %v1566 = vmul.f32 %v1562, %v667
      %v1567 = vmul.f32 %v1561, %v669
      %v1568 = vmul.f32 %v1560, %v671
      %v1569 = vmul.f32 %v1559, %v673
      %v1570 = vmul.f32 %v1558, %v675
      %v1571 = vmul.f32 %v1557, %v677
      %v1572 = vmul.f32 %v1564, %v679
      %v1573 = vrot.slane %v1429, 5
      %v1574 = vrot.slane %v1430, 5
      %v1575 = vrot.slane %v1431, 5
      %v1576 = vrot.slane %v1432, 5
      %v1577 = vrot.slane %v1433, 5
      %v1578 = vrot.slane %v1434, 5
      %v1579 = vrot.slane %v1435, 5
      %v1580 = vrot.slane %v1436, 5
      %v1581 = vsel %vm729, %v1579, %v1580
      %v1582 = vsel %vm729, %v1578, %v1579
      %v1583 = vsel %vm729, %v1577, %v1578
      %v1584 = vsel %vm729, %v1576, %v1577
      %v1585 = vsel %vm729, %v1575, %v1576
      %v1586 = vsel %vm729, %v1574, %v1575
      %v1587 = vsel %vm729, %v1573, %v1574
      %v1588 = vsel %vm729, %v1580, %v1573
      %v1589 = vmul.f32 %v1588, %v739
      %v1590 = vmul.f32 %v1587, %v741
      %v1591 = vmul.f32 %v1586, %v743
      %v1592 = vmul.f32 %v1585, %v745
      %v1593 = vmul.f32 %v1584, %v747
      %v1594 = vmul.f32 %v1583, %v749
      %v1595 = vmul.f32 %v1582, %v751
      %v1596 = vmul.f32 %v1581, %v753
      %v1597 = vrot.slane %v1429, 4
      %v1598 = vrot.slane %v1430, 4
      %v1599 = vrot.slane %v1431, 4
      %v1600 = vrot.slane %v1432, 4
      %v1601 = vrot.slane %v1433, 4
      %v1602 = vrot.slane %v1434, 4
      %v1603 = vrot.slane %v1435, 4
      %v1604 = vrot.slane %v1436, 4
      %v1605 = vsel %vm778, %v1603, %v1604
      %v1606 = vsel %vm778, %v1602, %v1603
      %v1607 = vsel %vm778, %v1601, %v1602
      %v1608 = vsel %vm778, %v1600, %v1601
      %v1609 = vsel %vm778, %v1599, %v1600
      %v1610 = vsel %vm778, %v1598, %v1599
      %v1611 = vsel %vm778, %v1597, %v1598
      %v1612 = vsel %vm778, %v1604, %v1597
      %v1613 = vmul.f32 %v1611, %v739
      %v1614 = vmul.f32 %v1610, %v741
      %v1615 = vmul.f32 %v1609, %v743
      %v1616 = vmul.f32 %v1608, %v745
      %v1617 = vmul.f32 %v1607, %v747
      %v1618 = vmul.f32 %v1606, %v749
      %v1619 = vmul.f32 %v1605, %v751
      %v1620 = vmul.f32 %v1612, %v753
      %v1621 = vmul.f32 %v1612, %v796
      %v1622 = vmul.f32 %v1611, %v798
      %v1623 = vmul.f32 %v1610, %v800
      %v1624 = vmul.f32 %v1609, %v802
      %v1625 = vmul.f32 %v1608, %v804
      %v1626 = vmul.f32 %v1607, %v806
      %v1627 = vmul.f32 %v1606, %v808
      %v1628 = vmul.f32 %v1605, %v810
      %v1629 = vmax.f32 %v1461, %v1429
      %v1630 = vmax.f32 %v1462, %v1430
      %v1631 = vmax.f32 %v1463, %v1431
      %v1632 = vmax.f32 %v1464, %v1432
      %v1633 = vmax.f32 %v1465, %v1433
      %v1634 = vmax.f32 %v1466, %v1434
      %v1635 = vmax.f32 %v1467, %v1435
      %v1636 = vmax.f32 %v1468, %v1436
      %v1637 = vmax.f32 %v1629, %v1493
      %v1638 = vmax.f32 %v1630, %v1494
      %v1639 = vmax.f32 %v1631, %v1495
      %v1640 = vmax.f32 %v1632, %v1496
      %v1641 = vmax.f32 %v1633, %v1497
      %v1642 = vmax.f32 %v1634, %v1498
      %v1643 = vmax.f32 %v1635, %v1499
      %v1644 = vmax.f32 %v1636, %v1500
      %1653 = vrot.lane.b32.xlu0 %v1453, 96
      %v1654 = vpop.permute.xlu0 %1653
      %1655 = vrot.lane.b32.xlu0 %v1454, 96
      %v1656 = vpop.permute.xlu0 %1655
      %1657 = vrot.lane.b32.xlu0 %v1455, 96
      %v1658 = vpop.permute.xlu0 %1657
      %1659 = vrot.lane.b32.xlu0 %v1456, 96
      %v1660 = vpop.permute.xlu0 %1659
      %1661 = vrot.lane.b32.xlu0 %v1457, 96
      %v1662 = vpop.permute.xlu0 %1661
      %1663 = vrot.lane.b32.xlu0 %v1458, 96
      %v1664 = vpop.permute.xlu0 %1663
      %1665 = vrot.lane.b32.xlu0 %v1459, 96
      %v1666 = vpop.permute.xlu0 %1665
      %1667 = vrot.lane.b32.xlu0 %v1460, 96
      %v1668 = vpop.permute.xlu0 %1667
      %1685 = vrot.lane.b32.xlu0 %v1485, 104
      %v1686 = vpop.permute.xlu0 %1685
      %1687 = vrot.lane.b32.xlu0 %v1486, 104
      %v1688 = vpop.permute.xlu0 %1687
      %1689 = vrot.lane.b32.xlu0 %v1487, 104
      %v1690 = vpop.permute.xlu0 %1689
      %1691 = vrot.lane.b32.xlu0 %v1488, 104
      %v1692 = vpop.permute.xlu0 %1691
      %1693 = vrot.lane.b32.xlu0 %v1489, 104
      %v1694 = vpop.permute.xlu0 %1693
      %1695 = vrot.lane.b32.xlu0 %v1490, 104
      %v1696 = vpop.permute.xlu0 %1695
      %1697 = vrot.lane.b32.xlu0 %v1491, 104
      %v1698 = vpop.permute.xlu0 %1697
      %1699 = vrot.lane.b32.xlu0 %v1492, 104
      %v1700 = vpop.permute.xlu0 %1699
      %1717 = vrot.lane.b32.xlu0 %v1517, 104
      %v1718 = vpop.permute.xlu0 %1717
      %1719 = vrot.lane.b32.xlu0 %v1518, 104
      %v1720 = vpop.permute.xlu0 %1719
      %1721 = vrot.lane.b32.xlu0 %v1519, 104
      %v1722 = vpop.permute.xlu0 %1721
      %1723 = vrot.lane.b32.xlu0 %v1520, 104
      %v1724 = vpop.permute.xlu0 %1723
      %1725 = vrot.lane.b32.xlu0 %v1521, 104
      %v1726 = vpop.permute.xlu0 %1725
      %1727 = vrot.lane.b32.xlu0 %v1522, 104
      %v1728 = vpop.permute.xlu0 %1727
      %1729 = vrot.lane.b32.xlu0 %v1523, 104
      %v1730 = vpop.permute.xlu0 %1729
      %1731 = vrot.lane.b32.xlu0 %v1524, 104
      %v1732 = vpop.permute.xlu0 %1731
      %1749 = vrot.lane.b32.xlu0 %v1541, 112
      %v1750 = vpop.permute.xlu0 %1749
      %1751 = vrot.lane.b32.xlu0 %v1542, 112
      %v1752 = vpop.permute.xlu0 %1751
      %1753 = vrot.lane.b32.xlu0 %v1543, 112
      %v1754 = vpop.permute.xlu0 %1753
      %1755 = vrot.lane.b32.xlu0 %v1544, 112
      %v1756 = vpop.permute.xlu0 %1755
      %1757 = vrot.lane.b32.xlu0 %v1545, 112
      %v1758 = vpop.permute.xlu0 %1757
      %1759 = vrot.lane.b32.xlu0 %v1546, 112
      %v1760 = vpop.permute.xlu0 %1759
      %1761 = vrot.lane.b32.xlu0 %v1547, 112
      %v1762 = vpop.permute.xlu0 %1761
      %1763 = vrot.lane.b32.xlu0 %v1548, 112
      %v1764 = vpop.permute.xlu0 %1763
      %1781 = vrot.lane.b32.xlu0 %v1565, 112
      %v1782 = vpop.permute.xlu0 %1781
      %1783 = vrot.lane.b32.xlu0 %v1566, 112
      %v1784 = vpop.permute.xlu0 %1783
      %1785 = vrot.lane.b32.xlu0 %v1567, 112
      %v1786 = vpop.permute.xlu0 %1785
      %1787 = vrot.lane.b32.xlu0 %v1568, 112
      %v1788 = vpop.permute.xlu0 %1787
      %1789 = vrot.lane.b32.xlu0 %v1569, 112
      %v1790 = vpop.permute.xlu0 %1789
      %1791 = vrot.lane.b32.xlu0 %v1570, 112
      %v1792 = vpop.permute.xlu0 %1791
      %1793 = vrot.lane.b32.xlu0 %v1571, 112
      %v1794 = vpop.permute.xlu0 %1793
      %1795 = vrot.lane.b32.xlu0 %v1572, 112
      %v1796 = vpop.permute.xlu0 %1795
      %1813 = vrot.lane.b32.xlu0 %v1589, 120
      %v1814 = vpop.permute.xlu0 %1813
      %1815 = vrot.lane.b32.xlu0 %v1590, 120
      %v1816 = vpop.permute.xlu0 %1815
      %1817 = vrot.lane.b32.xlu0 %v1591, 120
      %v1818 = vpop.permute.xlu0 %1817
      %1819 = vrot.lane.b32.xlu0 %v1592, 120
      %v1820 = vpop.permute.xlu0 %1819
      %1821 = vrot.lane.b32.xlu0 %v1593, 120
      %v1822 = vpop.permute.xlu0 %1821
      %1823 = vrot.lane.b32.xlu0 %v1594, 120
      %v1824 = vpop.permute.xlu0 %1823
      %1825 = vrot.lane.b32.xlu0 %v1595, 120
      %v1826 = vpop.permute.xlu0 %1825
      %1827 = vrot.lane.b32.xlu0 %v1596, 120
      %v1828 = vpop.permute.xlu0 %1827
      %1845 = vrot.lane.b32.xlu0 %v1613, 120
      %v1846 = vpop.permute.xlu0 %1845
      %1847 = vrot.lane.b32.xlu0 %v1614, 120
      %v1848 = vpop.permute.xlu0 %1847
      %1849 = vrot.lane.b32.xlu0 %v1615, 120
      %v1850 = vpop.permute.xlu0 %1849
      %1851 = vrot.lane.b32.xlu0 %v1616, 120
      %v1852 = vpop.permute.xlu0 %1851
      %1853 = vrot.lane.b32.xlu0 %v1617, 120
      %v1854 = vpop.permute.xlu0 %1853
      %1855 = vrot.lane.b32.xlu0 %v1618, 120
      %v1856 = vpop.permute.xlu0 %1855
      %1857 = vrot.lane.b32.xlu0 %v1619, 120
      %v1858 = vpop.permute.xlu0 %1857
      %1859 = vrot.lane.b32.xlu0 %v1620, 120
      %v1860 = vpop.permute.xlu0 %1859
      %v1869 = vsel %vm1067, %v1429, %v1654
      %v1870 = vsel %vm1067, %v1430, %v1656
      %v1871 = vsel %vm1067, %v1431, %v1658
      %v1872 = vsel %vm1067, %v1432, %v1660
      %v1873 = vsel %vm1067, %v1433, %v1662
      %v1874 = vsel %vm1067, %v1434, %v1664
      %v1875 = vsel %vm1067, %v1435, %v1666
      %v1876 = vsel %vm1067, %v1436, %v1668
      %v1877 = vsel %vm1076, %v1869, %v1686
      %v1878 = vsel %vm1076, %v1870, %v1688
      %v1879 = vsel %vm1076, %v1871, %v1690
      %v1880 = vsel %vm1076, %v1872, %v1692
      %v1881 = vsel %vm1076, %v1873, %v1694
      %v1882 = vsel %vm1076, %v1874, %v1696
      %v1883 = vsel %vm1076, %v1875, %v1698
      %v1884 = vsel %vm1076, %v1876, %v1700
      %v1885 = vsel %vm1085, %v1877, %v1718
      %v1886 = vsel %vm1085, %v1878, %v1720
      %v1887 = vsel %vm1085, %v1879, %v1722
      %v1888 = vsel %vm1085, %v1880, %v1724
      %v1889 = vsel %vm1085, %v1881, %v1726
      %v1890 = vsel %vm1085, %v1882, %v1728
      %v1891 = vsel %vm1085, %v1883, %v1730
      %v1892 = vsel %vm1085, %v1884, %v1732
      %v1893 = vsel %vm1094, %v1885, %v1750
      %v1894 = vsel %vm1094, %v1886, %v1752
      %v1895 = vsel %vm1094, %v1887, %v1754
      %v1896 = vsel %vm1094, %v1888, %v1756
      %v1897 = vsel %vm1094, %v1889, %v1758
      %v1898 = vsel %vm1094, %v1890, %v1760
      %v1899 = vsel %vm1094, %v1891, %v1762
      %v1900 = vsel %vm1094, %v1892, %v1764
      %v1901 = vsel %vm1103, %v1782, %v1814
      %v1902 = vsel %vm1103, %v1784, %v1816
      %v1903 = vsel %vm1103, %v1786, %v1818
      %v1904 = vsel %vm1103, %v1788, %v1820
      %v1905 = vsel %vm1103, %v1790, %v1822
      %v1906 = vsel %vm1103, %v1792, %v1824
      %v1907 = vsel %vm1103, %v1794, %v1826
      %v1908 = vsel %vm1103, %v1796, %v1828
      %v1909 = vsel %vm330, %v1901, %v1846
      %v1910 = vsel %vm330, %v1902, %v1848
      %v1911 = vsel %vm330, %v1903, %v1850
      %v1912 = vsel %vm330, %v1904, %v1852
      %v1913 = vsel %vm330, %v1905, %v1854
      %v1914 = vsel %vm330, %v1906, %v1856
      %v1915 = vsel %vm330, %v1907, %v1858
      %v1916 = vsel %vm330, %v1908, %v1860
      %v1917 = vsel %vm1120, %v1909, %v1621
      %v1918 = vsel %vm1120, %v1910, %v1622
      %v1919 = vsel %vm1120, %v1911, %v1623
      %v1920 = vsel %vm1120, %v1912, %v1624
      %v1921 = vsel %vm1120, %v1913, %v1625
      %v1922 = vsel %vm1120, %v1914, %v1626
      %v1923 = vsel %vm1120, %v1915, %v1627
      %v1924 = vsel %vm1120, %v1916, %v1628
      %v1925 = vsel %vm1129, %v1917, %v1637
      %v1926 = vsel %vm1129, %v1918, %v1638
      %v1927 = vsel %vm1129, %v1919, %v1639
      %v1928 = vsel %vm1129, %v1920, %v1640
      %v1929 = vsel %vm1129, %v1921, %v1641
      %v1930 = vsel %vm1129, %v1922, %v1642
      %v1931 = vsel %vm1129, %v1923, %v1643
      %v1932 = vsel %vm1129, %v1924, %v1644
      %v1934 = vsel %vm1144, %v1925, 0
      %v1937 = vsel %vm1144, %v1926, 0
      %v1940 = vsel %vm1144, %v1927, 0
      %v1943 = vsel %vm1144, %v1928, 0
      %v1946 = vsel %vm1144, %v1929, 0
      %v1949 = vsel %vm1144, %v1930, 0
      %v1952 = vsel %vm1144, %v1931, 0
      %v1955 = vsel %vm1144, %v1932, 0
      %1957 = vmatprep.subr.mxu0 0.0
      %1958 = vmatpush1.msra.mxu0 %v301
      %1959 = vmatprep.subr.mxu0 0.0
      %1960 = vmatpush1.msra.mxu0 %v300
      %1961 = vmatprep.subr.mxu0 0.0
      %1962 = vmatpush1.msra.mxu0 %v299
      %1963 = vmatprep.subr.mxu0 0.0
      %1964 = vmatpush1.msra.mxu0 %v298
      %1965 = vmatprep.subr.mxu0 0.0
      %1966 = vmatpush1.msra.mxu0 %v297
      %1967 = vmatprep.subr.mxu0 0.0
      %1968 = vmatpush1.msra.mxu0 %v296
      %1969 = vmatprep.subr.mxu0 0.0
      %1970 = vmatpush1.msra.mxu0 %v295
      %1971 = vmatprep.subr.mxu0 0.0
      %1972 = vmatpush1.msra.mxu0 %v294
      %1973 = vmatprep.subr.mxu0 0.0
      %1974 = vmatpush1.msra.mxu0 %v293
      %1975 = vmatprep.subr.mxu0 0.0
      %1976 = vmatpush1.msra.mxu0 %v292
      %1977 = vmatprep.subr.mxu0 0.0
      %1978 = vmatpush1.msra.mxu0 %v291
      %1979 = vmatprep.subr.mxu0 0.0
      %1980 = vmatpush1.msra.mxu0 %v290
      %1981 = vmatprep.subr.mxu0 0.0
      %1982 = vmatpush1.msra.mxu0 %v289
      %1983 = vmatprep.subr.mxu0 0.0
      %1984 = vmatpush1.msra.mxu0 %v288
      %1985 = vmatprep.subr.mxu0 0.0
      %1986 = vmatpush1.msra.mxu0 %v287
      %1987 = vmatprep.subr.mxu0 0.0
      %1988 = vmatpush1.msra.mxu0 %v286
      %1989 = vmatprep.subr.mxu0 0.0
      %1990 = vmatpush2.msra.mxu0 0.0
      %1991 = vmatprep.subr.mxu0 0.0
      %1992 = vmatpush2.msra.mxu0 0.0
      %1993 = vmatprep.subr.mxu0 0.0
      %1994 = vmatpush2.msra.mxu0 0.0
      %1995 = vmatprep.subr.mxu0 0.0
      %1996 = vmatpush2.msra.mxu0 0.0
      %1997 = vmatprep.subr.mxu0 0.0
      %1998 = vmatpush2.msra.mxu0 0.0
      %1999 = vmatprep.subr.mxu0 0.0
      %2000 = vmatpush2.msra.mxu0 0.0
      %2001 = vmatprep.subr.mxu0 0.0
      %2002 = vmatpush2.msra.mxu0 0.0
      %2003 = vmatprep.subr.mxu0 0.0
      %2004 = vmatpush2.msra.mxu0 0.0
      %2005 = vmatprep.subr.mxu0 0.0
      %2006 = vmatpush2.msra.mxu0 0.0
      %2007 = vmatprep.subr.mxu0 0.0
      %2008 = vmatpush2.msra.mxu0 0.0
      %2009 = vmatprep.subr.mxu0 0.0
      %2010 = vmatpush2.msra.mxu0 0.0
      %2011 = vmatprep.subr.mxu0 0.0
      %2012 = vmatpush2.msra.mxu0 %v306
      %2013 = vmatprep.subr.mxu0 0.0
      %2014 = vmatpush2.msra.mxu0 %v305
      %2015 = vmatprep.subr.mxu0 0.0
      %2016 = vmatpush2.msra.mxu0 %v304
      %2017 = vmatprep.subr.mxu0 0.0
      %2018 = vmatpush2.msra.mxu0 %v303
      %2019 = vmatprep.subr.mxu0 0.0
      %2020 = vmatpush2.msra.mxu0 %v302
      %2021 = vmatprep.mubr.f32.mxu0 %v1934
      %2022 = vmatmul.mubr.f32.gmra.mxu0 %v1893
      %v2023 = vpop.f32.mrf.mxu0
      %v2024 = vadd.f32 %v1142, %v2023
      %v2025 = vpop.f32.mrf.mxu0
      %2026 = vmatprep.mubr.f32.mxu0 %v1937
      %2027 = vmatmul.mubr.f32.gmra.mxu0 %v1894
      %v2028 = vpop.f32.mrf.mxu0
      %v2029 = vadd.f32 %v1142, %v2028
      %v2030 = vpop.f32.mrf.mxu0
      %2031 = vmatprep.mubr.f32.mxu0 %v1940
      %2032 = vmatmul.mubr.f32.gmra.mxu0 %v1895
      %v2033 = vpop.f32.mrf.mxu0
      %v2034 = vadd.f32 %v1142, %v2033
      %v2035 = vpop.f32.mrf.mxu0
      %2036 = vmatprep.mubr.f32.mxu0 %v1943
      %2037 = vmatmul.mubr.f32.gmra.mxu0 %v1896
      %v2038 = vpop.f32.mrf.mxu0
      %v2039 = vadd.f32 %v1142, %v2038
      %v2040 = vpop.f32.mrf.mxu0
      %2041 = vmatprep.mubr.f32.mxu0 %v1946
      %2042 = vmatmul.mubr.f32.gmra.mxu0 %v1897
      %v2043 = vpop.f32.mrf.mxu0
      %v2044 = vadd.f32 %v1142, %v2043
      %v2045 = vpop.f32.mrf.mxu0
      %2046 = vmatprep.mubr.f32.mxu0 %v1949
      %2047 = vmatmul.mubr.f32.gmra.mxu0 %v1898
      %v2048 = vpop.f32.mrf.mxu0
      %v2049 = vadd.f32 %v1142, %v2048
      %v2050 = vpop.f32.mrf.mxu0
      %2051 = vmatprep.mubr.f32.mxu0 %v1952
      %2052 = vmatmul.mubr.f32.gmra.mxu0 %v1899
      %v2053 = vpop.f32.mrf.mxu0
      %v2054 = vadd.f32 %v1142, %v2053
      %v2055 = vpop.f32.mrf.mxu0
      %2056 = vmatprep.mubr.f32.mxu0 %v1955
      %2057 = vmatmul.mubr.f32.gmra.mxu0 %v1900
      %v2058 = vpop.f32.mrf.mxu0
      %v2059 = vadd.f32 %v1142, %v2058
      %v2060 = vpop.f32.mrf.mxu0
      %2061 = vdwg.mxu0
      %v2062 = vmax.f32 %v2024, 0.0
      %v2063 = vmax.f32 %v2029, 0.0
      %v2064 = vmax.f32 %v2034, 0.0
      %v2065 = vmax.f32 %v2039, 0.0
      %v2066 = vmax.f32 %v2044, 0.0
      %v2067 = vmax.f32 %v2049, 0.0
      %v2068 = vmax.f32 %v2054, 0.0
      %v2069 = vmax.f32 %v2059, 0.0
      %s2070 = scalar_lea.vmem %s280, 64
      %2071 = vst.msk [vmem:[%s2070] sm:$0xff] %vm1282, %v2062
      %2072 = vst.msk [vmem:[%s2070 + $0x8] sm:$0xff] %vm1282, %v2063
      %2073 = vst.msk [vmem:[%s2070 + $0x10] sm:$0xff] %vm1282, %v2064
      %2074 = vst.msk [vmem:[%s2070 + $0x18] sm:$0xff] %vm1282, %v2065
      %2075 = vst.msk [vmem:[%s2070 + $0x20] sm:$0xff] %vm1282, %v2066
      %2076 = vst.msk [vmem:[%s2070 + $0x28] sm:$0xff] %vm1282, %v2067
      %2077 = vst.msk [vmem:[%s2070 + $0x30] sm:$0xff] %vm1282, %v2068
      %2078 = vst.msk [vmem:[%s2070 + $0x38] sm:$0xff] %vm1282, %v2069
      %s2079 = smul.u32 16, %s18
      %p2080 = scmp.lt.s32.totalorder %s2079, 31
      %s2081 = scalar_select %p2080, %s2079, 31
      %s2082 = smul.addr %s2081, 8
      %s2083 = scalar_lea.vmem %s7, %s2082
      // Predicated region
      $region49: #{tpu_custom_call.1} parent=47 // pred_check
        %p2084 = pneg %p188
      $region50: #{tpu_custom_call.1} parent=47 // pred_check_branch
        %2086 = sbr.rel (%p2084) target = $region52
      $region51: #{tpu_custom_call.1} parent=47 // pred_region
        %s2087 = smul.u32 16, %s18
      $region52: #{tpu_custom_call.1} parent=47 // pred_fallthru
        _
    $region48: #{tpu_custom_call.1} parent=5 // pred_fallthru
      _
    %p2088 = scmp.le.s32.totalorder 2, %s13
    // Predicated region
    $region53: #{tpu_custom_call.1} parent=5 // pred_check
      %p2089 = pneg %p2088
    $region54: #{tpu_custom_call.1} parent=5 // pred_check_branch
      %2091 = sbr.rel (%p2089) target = $region56
    $region55: #{tpu_custom_call.1} parent=5 // pred_region
      %s2092 = ssub.s32 %s13, 2
      // Predicated region
      $region57: #{tpu_custom_call.1} parent=55 // pred_check
        %p2093 = pneg %p194
      $region58: #{tpu_custom_call.1} parent=55 // pred_check_branch
        %2095 = sbr.rel (%p2093) target = $region60
      $region59: #{tpu_custom_call.1} parent=55 // pred_region
        %s2096 = smul.u32 16, %s19
        %p2097 = scmp.lt.s32.totalorder %s2096, 31
        %s2098 = scalar_select %p2097, %s2096, 31
        %s2099 = smul.addr %s2098, 8
        %s2100 = scalar_lea.vmem %s7, %s2099
      $region60: #{tpu_custom_call.1} parent=55 // pred_fallthru
        _
    $region56: #{tpu_custom_call.1} parent=5 // pred_fallthru
      _
  $region6: #{tpu_custom_call.1} parent=0 // loop_footer
    %s17 = sadd.s32 1, %s13
  $region7: #{tpu_custom_call.1} parent=0 // loop_footer_branch
    %12 = sbr.rel target = $region3
  $region8: #{tpu_custom_call.1} parent=0 // loop_exit
    _

</llo_original>
